<compile_context>
chip_gen: v7x
topology: tpu7x:2x2x1
jax: 0.10.0
libtpu: 0.0.40
codegen_flags: <defaults>
</compile_context>

<pallas_src>
import functools

import jax
import jax.numpy as jnp
from jax.experimental import pallas as pl
from jax.experimental.pallas import tpu as pltpu

_LANE = 128
_SUBLANE = 8


def _round_up(x, m):
    return (x + m - 1) // m * m


def _vmem_capacity_bytes():
    try:
        info = pltpu.get_tpu_info()
        cap = getattr(info, "vmem_capacity_bytes", None)
        if cap:
            return int(cap)
    except Exception:
        pass
    return 64 * 1024 * 1024  # conservative default: v7x per-TensorCore VMEM


def _attention_kernel(q_ref, k_ref, v_ref,
                      wq_ref, bq_ref,
                      wk_ref, bk_ref,
                      wv_ref, bv_ref,
                      wo_ref, bo_ref,
                      out_ref, attn_ref,
                      k_scr, v_scr,
                      *, sk_valid):
    bt, tq, e_p = q_ref.shape
    sk_p = k_ref.shape[1]
    kd_p = wq_ref.shape[1]
    vd_p = wv_ref.shape[1]

    # ---- K/V projections: only at the first q-tile of each batch tile
    # (q-tile grid axis is innermost + "arbitrary"), cached in VMEM as bf16
    # MXU operands for all subsequent q-tiles of this batch tile.
    @pl.when(pl.program_id(1) == 0)
    def _project_kv():
        k2 = k_ref[...].reshape(bt * sk_p, e_p)
        v2 = v_ref[...].reshape(bt * sk_p, e_p)
        kp = jnp.dot(k2, wk_ref[...], preferred_element_type=jnp.float32) + bk_ref[...]
        vp = jnp.dot(v2, wv_ref[...], preferred_element_type=jnp.float32) + bv_ref[...]
        k_scr[...] = kp.reshape(bt, sk_p, kd_p).astype(jnp.bfloat16)
        v_scr[...] = vp.reshape(bt, sk_p, vd_p).astype(jnp.bfloat16)

    # ---- Q projection: (batch, q rows) folded into one big M dimension.
    # 1/sqrt(embed_dim) is already folded into wq/bq by the wrapper.
    q2 = q_ref[...].reshape(bt * tq, e_p)
    q = jnp.dot(q2, wq_ref[...], preferred_element_type=jnp.float32) + bq_ref[...]
    q = q.reshape(bt, tq, kd_p).astype(jnp.bfloat16)

    # ---- energy = einsum('bqd,bkd->bqk'): contract last axes directly
    # (no explicit K transpose), bf16 operands, f32 accumulation.
    energy = jax.lax.dot_general(
        q, k_scr[...], dimension_numbers=(((2,), (2,)), ((0,), (0,))),
        preferred_element_type=jnp.float32)                      # (bt, tq, sk_p)

    # Mask padded key columns (static branch: only emitted when Sk was padded).
    if sk_valid != sk_p:
        col = jax.lax.broadcasted_iota(jnp.int32, energy.shape, 2)
        energy = jnp.where(col < sk_valid, energy, jnp.float32(-1e30))

    # ---- softmax over keys in f32 (v5e-safe). Reciprocal on the EUP slot
    # plus one Newton step to keep full f32 accuracy.
    mx = jnp.max(energy, axis=-1, keepdims=True)
    ex = jnp.exp(energy - mx)
    denom = jnp.sum(ex, axis=-1, keepdims=True)
    r = pl.reciprocal(denom, approx=True)
    r = r * (2.0 - denom * r)
    attn = ex * r

    # ---- context = einsum('bqk,bkd->bqd'), then output projection.
    ctx = jax.lax.dot_general(
        attn.astype(jnp.bfloat16), v_scr[...],
        dimension_numbers=(((2,), (1,)), ((0,), (0,))),
        preferred_element_type=jnp.float32)                      # (bt, tq, vd_p)

    out = jnp.dot(ctx.reshape(bt * tq, vd_p).astype(jnp.bfloat16), wo_ref[...],
                  preferred_element_type=jnp.float32) + bo_ref[...]

    out_ref[...] = out.reshape(bt, tq, vd_p).astype(out_ref.dtype)
    # The module returns the full attention matrix, so it must be materialized.
    attn_ref[...] = attn.astype(attn_ref.dtype)


def attention_forward(query, key, value, params, *, embed_dim,
                      tq_max=256, bt_max=8):
    N, Sq, E = query.shape
    _, Sk, _ = key.shape
    kdim = params["wq"].shape[1]
    vdim = params["wv"].shape[1]

    # Pad feature / key axes to lane multiples (128) and the query tile to a
    # sublane multiple (8): lane-dense stores + (8,128)-aligned MXU tiles.
    e_p = _round_up(E, _LANE)
    kd_p = _round_up(kdim, _LANE)
    vd_p = _round_up(vdim, _LANE)
    sk_p = _round_up(Sk, _LANE)

    tq = min(tq_max, _round_up(Sq, _SUBLANE))

    vmem_cap = _vmem_capacity_bytes()
    vmem_limit = min((vmem_cap * 3) // 4, 100 * 1024 * 1024)   # 48 MiB v7x, 96 MiB v6e/v5e
    step_budget = (vmem_limit * 9) // 20                        # ~45% of the limit

    def _step_bytes(bt_, tq_):
        bf, f4 = 2, 4
        inp = 2 * bt_ * (tq_ * e_p + 2 * sk_p * e_p) * bf            # dbl-buf bf16 inputs
        outp = 2 * bt_ * (tq_ * vd_p + tq_ * sk_p) * f4              # dbl-buf f32 outputs
        wts = 2 * (2 * e_p * kd_p + e_p * vd_p + vd_p * vd_p) * bf   # dbl-buf bf16 weights
        bss = 2 * (2 * kd_p + 2 * vd_p) * f4                         # biases
        scr = bt_ * sk_p * (kd_p + vd_p) * bf                        # cached K/V projections
        tmp = bt_ * (tq_ * kd_p + 2 * tq_ * sk_p + tq_ * vd_p) * f4  # q / energy,exp / ctx
        return inp + outp + wts + bss + scr + tmp

    # Fold enough batch rows into the projection M dim (~256 rows), then shrink
    # bt / tq until the fully-accounted per-step working set fits the budget.
    bt = max(1, min(N, bt_max, max(1, 256 // tq)))
    while bt > 1 and _step_bytes(bt, tq) > step_budget:
        bt -= 1
    while tq > _SUBLANE and _step_bytes(bt, tq) > step_budget:
        tq = max(_SUBLANE, _round_up(tq // 2, _SUBLANE))
    # TODO(synk): add an Sk grid axis with online softmax for sequences whose
    # K/V working set still exceeds the VMEM budget at bt=1, tq=8.

    sq_p = _round_up(Sq, tq)

    # Keep >= 2 grid steps when possible so both v7x TensorCores get work.
    if N >= 2 and (_round_up(N, bt) // bt) * (sq_p // tq) < 2:
        bt = max(1, N // 2)
    n_p = _round_up(N, bt)

    vmem_limit = max(vmem_limit, min(vmem_cap, int(1.5 * _step_bytes(bt, tq))))

    bf16, f32 = jnp.bfloat16, jnp.float32

    def pad_cast(x, shape, dtype):
        pads = [(0, t - s) for s, t in zip(x.shape, shape)]
        if any(p[1] for p in pads):
            x = jnp.pad(x, pads)
        return x.astype(dtype)

    q_p = pad_cast(query, (n_p, sq_p, e_p), bf16)
    k_p = pad_cast(key, (n_p, sk_p, e_p), bf16)
    v_p = pad_cast(value, (n_p, sk_p, e_p), bf16)

    scale = 1.0 / (embed_dim ** 0.5)
    wq = pad_cast(params["wq"] * scale, (e_p, kd_p), bf16)
    bq = pad_cast(params["bq"] * scale, (1, kd_p), f32)
    wk = pad_cast(params["wk"], (e_p, kd_p), bf16)
    bk = pad_cast(params["bk"], (1, kd_p), f32)
    wv = pad_cast(params["wv"], (e_p, vd_p), bf16)
    bv = pad_cast(params["bv"], (1, vd_p), f32)
    wo = pad_cast(params["wo"], (vd_p, vd_p), bf16)
    bo = pad_cast(params["bo"], (1, vd_p), f32)

    kernel = functools.partial(_attention_kernel, sk_valid=Sk)

    grid = (n_p // bt, sq_p // tq)
    full = lambda b, i: (0, 0)   # weights / biases: one resident block

    flops = 2 * N * (Sq * E * kdim + Sk * E * kdim + Sk * E * vdim
                     + Sq * Sk * kdim + Sq * Sk * vdim + Sq * vdim * vdim)
    bytes_accessed = (2 * (int(query.size) + int(key.size) + int(value.size))
                      + 2 * (int(wq.size) + int(wk.size) + int(wv.size) + int(wo.size))
                      + 4 * (int(bq.size) + int(bk.size) + int(bv.size) + int(bo.size))
                      + 4 * (N * Sq * vdim + N * Sq * Sk))
    cost = pl.CostEstimate(flops=flops, transcendentals=N * Sq * Sk,
                           bytes_accessed=int(bytes_accessed))

    out_p, attn_p = pl.pallas_call(
        kernel,
        out_shape=(
            jax.ShapeDtypeStruct((n_p, sq_p, vd_p), f32),
            jax.ShapeDtypeStruct((n_p, sq_p, sk_p), f32),
        ),
        grid=grid,
        in_specs=[
            pl.BlockSpec((bt, tq, e_p), lambda b, i: (b, i, 0)),     # query
            pl.BlockSpec((bt, sk_p, e_p), lambda b, i: (b, 0, 0)),   # key
            pl.BlockSpec((bt, sk_p, e_p), lambda b, i: (b, 0, 0)),   # value
            pl.BlockSpec((e_p, kd_p), full),                         # W_q (pre-scaled)
            pl.BlockSpec((1, kd_p), full),                           # b_q (pre-scaled)
            pl.BlockSpec((e_p, kd_p), full),                         # W_k
            pl.BlockSpec((1, kd_p), full),                           # b_k
            pl.BlockSpec((e_p, vd_p), full),                         # W_v
            pl.BlockSpec((1, vd_p), full),                           # b_v
            pl.BlockSpec((vd_p, vd_p), full),                        # W_out
            pl.BlockSpec((1, vd_p), full),                           # b_out
        ],
        out_specs=(
            pl.BlockSpec((bt, tq, vd_p), lambda b, i: (b, i, 0)),
            pl.BlockSpec((bt, tq, sk_p), lambda b, i: (b, i, 0)),
        ),
        scratch_shapes=[
            pltpu.VMEM((bt, sk_p, kd_p), jnp.bfloat16),   # cached projected K
            pltpu.VMEM((bt, sk_p, vd_p), jnp.bfloat16),   # cached projected V
        ],
        compiler_params=pltpu.CompilerParams(
            dimension_semantics=("parallel", "arbitrary"),
            vmem_limit_bytes=int(vmem_limit)),
        cost_estimate=cost,
    )(q_p, k_p, v_p, wq, bq, wk, bk, wv, bv, wo, bo)

    return out_p[:N, :Sq, :vdim], attn_p[:N, :Sq, :Sk]


def attention_reference(query, key, value, params, *, embed_dim):
    """Pure-JAX f32 reference mirroring the PyTorch forward."""
    v = value @ params["wv"] + params["bv"][0]
    k = key @ params["wk"] + params["bk"][0]
    q = (query @ params["wq"] + params["bq"][0]) / (embed_dim ** 0.5)
    energy = jnp.einsum("nqd,nkd->nqk", q, k)
    attn = jax.nn.softmax(energy, axis=2)
    out = jnp.einsum("nql,nld->nqd", attn, v)
    return out @ params["wo"] + params["bo"][0], attn


def _make_params(key, embed_dim, kdim, vdim):
    ks = jax.random.split(key, 8)
    s_in = 1.0 / (embed_dim ** 0.5)
    s_o = 1.0 / (vdim ** 0.5)
    return {
        "wq": jax.random.normal(ks[0], (embed_dim, kdim), jnp.float32) * s_in,
        "bq": jax.random.normal(ks[1], (1, kdim), jnp.float32) * 0.1,
        "wk": jax.random.normal(ks[2], (embed_dim, kdim), jnp.float32) * s_in,
        "bk": jax.random.normal(ks[3], (1, kdim), jnp.float32) * 0.1,
        "wv": jax.random.normal(ks[4], (embed_dim, vdim), jnp.float32) * s_in,
        "bv": jax.random.normal(ks[5], (1, vdim), jnp.float32) * 0.1,
        "wo": jax.random.normal(ks[6], (vdim, vdim), jnp.float32) * s_o,
        "bo": jax.random.normal(ks[7], (1, vdim), jnp.float32) * 0.1,
    }


def _check(N, Sq, Sk, embed_dim, kdim, vdim):
    root = jax.random.PRNGKey(0)
    kq, kk, kv, kp = jax.random.split(root, 4)
    query = jax.random.normal(kq, (N, Sq, embed_dim), jnp.float32)
    key_in = jax.random.normal(kk, (N, Sk, embed_dim), jnp.float32)
    value = jax.random.normal(kv, (N, Sk, embed_dim), jnp.float32)
    params = _make_params(kp, embed_dim, kdim, vdim)

    out, attn = attention_forward(query, key_in, value, params,
                                  embed_dim=embed_dim)
    jax.block_until_ready((out, attn))

    ref_out, ref_attn = attention_reference(query, key_in, value, params,
                                            embed_dim=embed_dim)
    assert out.shape == ref_out.shape and attn.shape == ref_attn.shape
    # bf16 MXU operands with f32 accumulation: tolerances are loosened vs. a
    # pure-f32 kernel (per the perf review), errors are still O(1e-3..1e-2).
    assert jnp.allclose(out, ref_out, atol=3e-2, rtol=3e-2), \
        float(jnp.max(jnp.abs(out - ref_out)))
    assert jnp.allclose(attn, ref_attn, atol=1.5e-2, rtol=1e-2), \
        float(jnp.max(jnp.abs(attn - ref_attn)))


if __name__ == "__main__":
    # Lane-aligned shapes: no padding, lane-dense stores, batch folded into the
    # MXU M dimension, grid split so both v7x TensorCores get a batch tile.
    _check(N=2, Sq=128, Sk=128, embed_dim=128, kdim=128, vdim=128)
    # Unaligned shapes: exercises pad-to-128 + padded-key masking.
    _check(N=3, Sq=24, Sk=40, embed_dim=48, kdim=32, vdim=80)
    print("KERNEL_OK")
</pallas_src>

<mosaic_0001>
module attributes {stable_mosaic.version = 11 : i64} {
  func.func @_attention_kernel(%arg0: i32, %arg1: i32, %arg2: memref<1x128x128xbf16, #tpu.memory_space<vmem>>, %arg3: memref<1x128x128xbf16, #tpu.memory_space<vmem>>, %arg4: memref<1x128x128xbf16, #tpu.memory_space<vmem>>, %arg5: memref<128x128xbf16, #tpu.memory_space<vmem>>, %arg6: memref<1x128xf32, #tpu.memory_space<vmem>>, %arg7: memref<128x128xbf16, #tpu.memory_space<vmem>>, %arg8: memref<1x128xf32, #tpu.memory_space<vmem>>, %arg9: memref<128x128xbf16, #tpu.memory_space<vmem>>, %arg10: memref<1x128xf32, #tpu.memory_space<vmem>>, %arg11: memref<128x128xbf16, #tpu.memory_space<vmem>>, %arg12: memref<1x128xf32, #tpu.memory_space<vmem>>, %arg13: memref<1x128x128xf32, #tpu.memory_space<vmem>>, %arg14: memref<1x128x128xf32, #tpu.memory_space<vmem>>, %arg15: memref<1x128x128xbf16, #tpu.memory_space<vmem>>, %arg16: memref<1x128x128xbf16, #tpu.memory_space<vmem>>) attributes {dimension_semantics = [#tpu.dimension_semantics<parallel>, #tpu.dimension_semantics<arbitrary>], iteration_bounds = array<i64: 2, 1>, scalar_prefetch = 0 : i64, scratch_operands = 2 : i64, tpu.core_type = #tpu.core_type<tc>, window_params = [{transform_indices = @transform_0, window_bounds = array<i64: 1, 128, 128>}, {transform_indices = @transform_1, window_bounds = array<i64: 1, 128, 128>}, {transform_indices = @transform_2, window_bounds = array<i64: 1, 128, 128>}, {pipeline_mode = #tpu.pipeline_mode<synchronous>, transform_indices = @transform_3, window_bounds = array<i64: 128, 128>}, {pipeline_mode = #tpu.pipeline_mode<synchronous>, transform_indices = @transform_4, window_bounds = array<i64: 1, 128>}, {pipeline_mode = #tpu.pipeline_mode<synchronous>, transform_indices = @transform_5, window_bounds = array<i64: 128, 128>}, {pipeline_mode = #tpu.pipeline_mode<synchronous>, transform_indices = @transform_6, window_bounds = array<i64: 1, 128>}, {pipeline_mode = #tpu.pipeline_mode<synchronous>, transform_indices = @transform_7, window_bounds = array<i64: 128, 128>}, {pipeline_mode = #tpu.pipeline_mode<synchronous>, transform_indices = @transform_8, window_bounds = array<i64: 1, 128>}, {pipeline_mode = #tpu.pipeline_mode<synchronous>, transform_indices = @transform_9, window_bounds = array<i64: 128, 128>}, {pipeline_mode = #tpu.pipeline_mode<synchronous>, transform_indices = @transform_10, window_bounds = array<i64: 1, 128>}, {transform_indices = @transform_11, window_bounds = array<i64: 1, 128, 128>}, {transform_indices = @transform_12, window_bounds = array<i64: 1, 128, 128>}]} {
    %c0_i32 = arith.constant 0 : i32
    %0 = arith.cmpi eq, %arg1, %c0_i32 : i32
    %1 = arith.extui %0 : i1 to i32
    %c0_i32_0 = arith.constant 0 : i32
    %2 = arith.cmpi ne, %1, %c0_i32_0 : i32
    scf.if %2 {
      %c0_29 = arith.constant 0 : index
      %c0_30 = arith.constant 0 : index
      %c0_31 = arith.constant 0 : index
      %41 = vector.load %arg3[%c0_29, %c0_30, %c0_31] : memref<1x128x128xbf16, #tpu.memory_space<vmem>>, vector<1x128x128xbf16>
      %42 = vector.shape_cast %41 : vector<1x128x128xbf16> to vector<128x128xbf16>
      %c0_32 = arith.constant 0 : index
      %c0_33 = arith.constant 0 : index
      %c0_34 = arith.constant 0 : index
      %43 = vector.load %arg4[%c0_32, %c0_33, %c0_34] : memref<1x128x128xbf16, #tpu.memory_space<vmem>>, vector<1x128x128xbf16>
      %44 = vector.shape_cast %43 : vector<1x128x128xbf16> to vector<128x128xbf16>
      %c0_35 = arith.constant 0 : index
      %c0_36 = arith.constant 0 : index
      %45 = vector.load %arg7[%c0_35, %c0_36] : memref<128x128xbf16, #tpu.memory_space<vmem>>, vector<128x128xbf16>
      %cst_37 = arith.constant dense<0.000000e+00> : vector<128x128xf32>
      %46 = tpu.matmul %42, %45, %cst_37 {dimension_numbers = #tpu.dot_dimension_numbers<[1], [0], [0], [1], [0, 0, 1, 1], [], []>} : vector<128x128xbf16>, vector<128x128xbf16>, vector<128x128xf32> -> vector<128x128xf32>
      %c0_38 = arith.constant 0 : index
      %c0_39 = arith.constant 0 : index
      %47 = vector.load %arg8[%c0_38, %c0_39] : memref<1x128xf32, #tpu.memory_space<vmem>>, vector<1x128xf32>
      %48 = vector.broadcast %47 : vector<1x128xf32> to vector<128x128xf32>
      %49 = arith.addf %46, %48 : vector<128x128xf32>
      %c0_40 = arith.constant 0 : index
      %c0_41 = arith.constant 0 : index
      %50 = vector.load %arg9[%c0_40, %c0_41] : memref<128x128xbf16, #tpu.memory_space<vmem>>, vector<128x128xbf16>
      %cst_42 = arith.constant dense<0.000000e+00> : vector<128x128xf32>
      %51 = tpu.matmul %44, %50, %cst_42 {dimension_numbers = #tpu.dot_dimension_numbers<[1], [0], [0], [1], [0, 0, 1, 1], [], []>} : vector<128x128xbf16>, vector<128x128xbf16>, vector<128x128xf32> -> vector<128x128xf32>
      %c0_43 = arith.constant 0 : index
      %c0_44 = arith.constant 0 : index
      %52 = vector.load %arg10[%c0_43, %c0_44] : memref<1x128xf32, #tpu.memory_space<vmem>>, vector<1x128xf32>
      %53 = vector.broadcast %52 : vector<1x128xf32> to vector<128x128xf32>
      %54 = arith.addf %51, %53 : vector<128x128xf32>
      %55 = vector.shape_cast %49 : vector<128x128xf32> to vector<1x128x128xf32>
      %56 = arith.truncf %55 : vector<1x128x128xf32> to vector<1x128x128xbf16>
      %c0_45 = arith.constant 0 : index
      %c0_46 = arith.constant 0 : index
      %c0_47 = arith.constant 0 : index
      %57 = vector.load %arg15[%c0_45, %c0_46, %c0_47] : memref<1x128x128xbf16, #tpu.memory_space<vmem>>, vector<1x128x128xbf16>
      tpu.vector_store %arg15[%c0_45, %c0_46, %c0_47], %56 {strides = array<i32>} : memref<1x128x128xbf16, #tpu.memory_space<vmem>>, vector<1x128x128xbf16>,
      %58 = vector.shape_cast %54 : vector<128x128xf32> to vector<1x128x128xf32>
      %59 = arith.truncf %58 : vector<1x128x128xf32> to vector<1x128x128xbf16>
      %c0_48 = arith.constant 0 : index
      %c0_49 = arith.constant 0 : index
      %c0_50 = arith.constant 0 : index
      %60 = vector.load %arg16[%c0_48, %c0_49, %c0_50] : memref<1x128x128xbf16, #tpu.memory_space<vmem>>, vector<1x128x128xbf16>
      tpu.vector_store %arg16[%c0_48, %c0_49, %c0_50], %59 {strides = array<i32>} : memref<1x128x128xbf16, #tpu.memory_space<vmem>>, vector<1x128x128xbf16>,
    } else {
    }
    %c0 = arith.constant 0 : index
    %c0_1 = arith.constant 0 : index
    %c0_2 = arith.constant 0 : index
    %3 = vector.load %arg2[%c0, %c0_1, %c0_2] : memref<1x128x128xbf16, #tpu.memory_space<vmem>>, vector<1x128x128xbf16>
    %4 = vector.shape_cast %3 : vector<1x128x128xbf16> to vector<128x128xbf16>
    %c0_3 = arith.constant 0 : index
    %c0_4 = arith.constant 0 : index
    %5 = vector.load %arg5[%c0_3, %c0_4] : memref<128x128xbf16, #tpu.memory_space<vmem>>, vector<128x128xbf16>
    %cst = arith.constant dense<0.000000e+00> : vector<128x128xf32>
    %6 = tpu.matmul %4, %5, %cst {dimension_numbers = #tpu.dot_dimension_numbers<[1], [0], [0], [1], [0, 0, 1, 1], [], []>} : vector<128x128xbf16>, vector<128x128xbf16>, vector<128x128xf32> -> vector<128x128xf32>
    %c0_5 = arith.constant 0 : index
    %c0_6 = arith.constant 0 : index
    %7 = vector.load %arg6[%c0_5, %c0_6] : memref<1x128xf32, #tpu.memory_space<vmem>>, vector<1x128xf32>
    %8 = vector.broadcast %7 : vector<1x128xf32> to vector<128x128xf32>
    %9 = arith.addf %6, %8 : vector<128x128xf32>
    %10 = vector.shape_cast %9 : vector<128x128xf32> to vector<1x128x128xf32>
    %11 = arith.truncf %10 : vector<1x128x128xf32> to vector<1x128x128xbf16>
    %c0_7 = arith.constant 0 : index
    %c0_8 = arith.constant 0 : index
    %c0_9 = arith.constant 0 : index
    %12 = vector.load %arg15[%c0_7, %c0_8, %c0_9] : memref<1x128x128xbf16, #tpu.memory_space<vmem>>, vector<1x128x128xbf16>
    %cst_10 = arith.constant dense<0.000000e+00> : vector<1x128x128xf32>
    %13 = tpu.matmul %11, %12, %cst_10 {dimension_numbers = #tpu.dot_dimension_numbers<[2], [2], [1], [1], [0, 0, 0, 1, 1, 1], [0], [0]>} : vector<1x128x128xbf16>, vector<1x128x128xbf16>, vector<1x128x128xf32> -> vector<1x128x128xf32>
    %cst_11 = arith.constant dense<0xFF800000> : vector<1x128xf32>
    %14 = vector.multi_reduction <maximumf>, %13, %cst_11 [2] : vector<1x128x128xf32> to vector<1x128xf32>
    %15 = vector.shape_cast %14 : vector<1x128xf32> to vector<1x128x1xf32>
    %16 = vector.broadcast %15 : vector<1x128x1xf32> to vector<1x128x128xf32>
    %17 = arith.subf %13, %16 : vector<1x128x128xf32>
    %18 = math.exp %17 : vector<1x128x128xf32>
    %cst_12 = arith.constant dense<0.000000e+00> : vector<1x128xf32>
    %19 = vector.multi_reduction <add>, %18, %cst_12 [2] : vector<1x128x128xf32> to vector<1x128xf32>
    %20 = vector.shape_cast %19 : vector<1x128xf32> to vector<1x128x1xf32>
    %21 = tpu.reciprocal %20 {approx = true} : vector<1x128x1xf32> -> vector<1x128x1xf32>
    %22 = arith.mulf %20, %21 : vector<1x128x1xf32>
    %cst_13 = arith.constant 2.000000e+00 : f32
    %23 = vector.broadcast %cst_13 : f32 to vector<1x128x1xf32>
    %24 = arith.subf %23, %22 : vector<1x128x1xf32>
    %25 = arith.mulf %21, %24 : vector<1x128x1xf32>
    %26 = vector.broadcast %25 : vector<1x128x1xf32> to vector<1x128x128xf32>
    %27 = arith.mulf %18, %26 : vector<1x128x128xf32>
    %28 = arith.truncf %27 : vector<1x128x128xf32> to vector<1x128x128xbf16>
    %c0_14 = arith.constant 0 : index
    %c0_15 = arith.constant 0 : index
    %c0_16 = arith.constant 0 : index
    %29 = vector.load %arg16[%c0_14, %c0_15, %c0_16] : memref<1x128x128xbf16, #tpu.memory_space<vmem>>, vector<1x128x128xbf16>
    %cst_17 = arith.constant dense<0.000000e+00> : vector<1x128x128xf32>
    %30 = tpu.matmul %28, %29, %cst_17 {dimension_numbers = #tpu.dot_dimension_numbers<[2], [1], [1], [2], [0, 0, 0, 1, 1, 2], [0], [0]>} : vector<1x128x128xbf16>, vector<1x128x128xbf16>, vector<1x128x128xf32> -> vector<1x128x128xf32>
    %31 = vector.shape_cast %30 : vector<1x128x128xf32> to vector<128x128xf32>
    %32 = arith.truncf %31 : vector<128x128xf32> to vector<128x128xbf16>
    %c0_18 = arith.constant 0 : index
    %c0_19 = arith.constant 0 : index
    %33 = vector.load %arg11[%c0_18, %c0_19] : memref<128x128xbf16, #tpu.memory_space<vmem>>, vector<128x128xbf16>
    %cst_20 = arith.constant dense<0.000000e+00> : vector<128x128xf32>
    %34 = tpu.matmul %32, %33, %cst_20 {dimension_numbers = #tpu.dot_dimension_numbers<[1], [0], [0], [1], [0, 0, 1, 1], [], []>} : vector<128x128xbf16>, vector<128x128xbf16>, vector<128x128xf32> -> vector<128x128xf32>
    %c0_21 = arith.constant 0 : index
    %c0_22 = arith.constant 0 : index
    %35 = vector.load %arg12[%c0_21, %c0_22] : memref<1x128xf32, #tpu.memory_space<vmem>>, vector<1x128xf32>
    %36 = vector.broadcast %35 : vector<1x128xf32> to vector<128x128xf32>
    %37 = arith.addf %34, %36 : vector<128x128xf32>
    %38 = vector.shape_cast %37 : vector<128x128xf32> to vector<1x128x128xf32>
    %c0_23 = arith.constant 0 : index
    %c0_24 = arith.constant 0 : index
    %c0_25 = arith.constant 0 : index
    %39 = vector.load %arg13[%c0_23, %c0_24, %c0_25] : memref<1x128x128xf32, #tpu.memory_space<vmem>>, vector<1x128x128xf32>
    tpu.vector_store %arg13[%c0_23, %c0_24, %c0_25], %38 {strides = array<i32>} : memref<1x128x128xf32, #tpu.memory_space<vmem>>, vector<1x128x128xf32>,
    %c0_26 = arith.constant 0 : index
    %c0_27 = arith.constant 0 : index
    %c0_28 = arith.constant 0 : index
    %40 = vector.load %arg14[%c0_26, %c0_27, %c0_28] : memref<1x128x128xf32, #tpu.memory_space<vmem>>, vector<1x128x128xf32>
    tpu.vector_store %arg14[%c0_26, %c0_27, %c0_28], %27 {strides = array<i32>} : memref<1x128x128xf32, #tpu.memory_space<vmem>>, vector<1x128x128xf32>,
    return
  }
  func.func @transform_0(%arg0: i32, %arg1: i32) -> (i32, i32, i32) {
    %c0_i32 = arith.constant 0 : i32
    %c0_i32_0 = arith.constant 0 : i32
    return %arg0, %arg1, %c0_i32 : i32, i32, i32
  }
  func.func @transform_1(%arg0: i32, %arg1: i32) -> (i32, i32, i32) {
    %c0_i32 = arith.constant 0 : i32
    %c0_i32_0 = arith.constant 0 : i32
    %c0_i32_1 = arith.constant 0 : i32
    return %arg0, %c0_i32, %c0_i32_0 : i32, i32, i32
  }
  func.func @transform_2(%arg0: i32, %arg1: i32) -> (i32, i32, i32) {
    %c0_i32 = arith.constant 0 : i32
    %c0_i32_0 = arith.constant 0 : i32
    %c0_i32_1 = arith.constant 0 : i32
    return %arg0, %c0_i32, %c0_i32_0 : i32, i32, i32
  }
  func.func @transform_3(%arg0: i32, %arg1: i32) -> (i32, i32) {
    %c0_i32 = arith.constant 0 : i32
    %c0_i32_0 = arith.constant 0 : i32
    %c0_i32_1 = arith.constant 0 : i32
    return %c0_i32, %c0_i32_0 : i32, i32
  }
  func.func @transform_4(%arg0: i32, %arg1: i32) -> (i32, i32) {
    %c0_i32 = arith.constant 0 : i32
    %c0_i32_0 = arith.constant 0 : i32
    %c0_i32_1 = arith.constant 0 : i32
    return %c0_i32, %c0_i32_0 : i32, i32
  }
  func.func @transform_5(%arg0: i32, %arg1: i32) -> (i32, i32) {
    %c0_i32 = arith.constant 0 : i32
    %c0_i32_0 = arith.constant 0 : i32
    %c0_i32_1 = arith.constant 0 : i32
    return %c0_i32, %c0_i32_0 : i32, i32
  }
  func.func @transform_6(%arg0: i32, %arg1: i32) -> (i32, i32) {
    %c0_i32 = arith.constant 0 : i32
    %c0_i32_0 = arith.constant 0 : i32
    %c0_i32_1 = arith.constant 0 : i32
    return %c0_i32, %c0_i32_0 : i32, i32
  }
  func.func @transform_7(%arg0: i32, %arg1: i32) -> (i32, i32) {
    %c0_i32 = arith.constant 0 : i32
    %c0_i32_0 = arith.constant 0 : i32
    %c0_i32_1 = arith.constant 0 : i32
    return %c0_i32, %c0_i32_0 : i32, i32
  }
  func.func @transform_8(%arg0: i32, %arg1: i32) -> (i32, i32) {
    %c0_i32 = arith.constant 0 : i32
    %c0_i32_0 = arith.constant 0 : i32
    %c0_i32_1 = arith.constant 0 : i32
    return %c0_i32, %c0_i32_0 : i32, i32
  }
  func.func @transform_9(%arg0: i32, %arg1: i32) -> (i32, i32) {
    %c0_i32 = arith.constant 0 : i32
    %c0_i32_0 = arith.constant 0 : i32
    %c0_i32_1 = arith.constant 0 : i32
    return %c0_i32, %c0_i32_0 : i32, i32
  }
  func.func @transform_10(%arg0: i32, %arg1: i32) -> (i32, i32) {
    %c0_i32 = arith.constant 0 : i32
    %c0_i32_0 = arith.constant 0 : i32
    %c0_i32_1 = arith.constant 0 : i32
    return %c0_i32, %c0_i32_0 : i32, i32
  }
  func.func @transform_11(%arg0: i32, %arg1: i32) -> (i32, i32, i32) {
    %c0_i32 = arith.constant 0 : i32
    %c0_i32_0 = arith.constant 0 : i32
    return %arg0, %arg1, %c0_i32 : i32, i32, i32
  }
  func.func @transform_12(%arg0: i32, %arg1: i32) -> (i32, i32, i32) {
    %c0_i32 = arith.constant 0 : i32
    %c0_i32_0 = arith.constant 0 : i32
    return %arg0, %arg1, %c0_i32 : i32, i32, i32
  }
}

</mosaic_0001>

<llo_original>
// kernel: tpu_custom_call.1
$region0: #{tpu_custom_call.1}
  #allocation0 [shape = 'u32[]', space=smem, size = 0x4, offset = 0x4, fixed_abs, tag = 'smem constant byte address 0x4 - core index']
  #allocation1 [shape = 'u32[144,128]{1,0:T(1,128)}', space=vmem, size = 0x12000, scoped, tag = 'internal scratch']
  #allocation2 [shape = 'bf16[1,128,128]{2,1,0:T(16,128)(2,1)}', space=vmem, size = 0x8000, scoped, tag = 'scratch operand']
  #allocation3 [shape = 'bf16[1,128,128]{2,1,0:T(16,128)(2,1)}', space=vmem, size = 0x8000, scoped, tag = 'scratch operand']
  %s0 = inlined_call_operand.hbm [shape: bf16[2,128,128], index: 0, kind: input, shape index: {}]
  %s1 = inlined_call_operand.hbm [shape: bf16[2,128,128], index: 1, kind: input, shape index: {}]
  %s2 = inlined_call_operand.hbm [shape: bf16[2,128,128], index: 2, kind: input, shape index: {}]
  %s3 = inlined_call_operand.hbm [shape: bf16[128,128], index: 3, kind: input, shape index: {}]
  %s4 = inlined_call_operand.vmem [shape: f32[1,128], index: 4, kind: input, shape index: {}]
  %s5 = inlined_call_operand.hbm [shape: bf16[128,128], index: 5, kind: input, shape index: {}]
  %s6 = inlined_call_operand.vmem [shape: f32[1,128], index: 6, kind: input, shape index: {}]
  %s7 = inlined_call_operand.hbm [shape: bf16[128,128], index: 7, kind: input, shape index: {}]
  %s8 = inlined_call_operand.vmem [shape: f32[1,128], index: 8, kind: input, shape index: {}]
  %s9 = inlined_call_operand.hbm [shape: bf16[128,128], index: 9, kind: input, shape index: {}]
  %s10 = inlined_call_operand.vmem [shape: f32[1,128], index: 10, kind: input, shape index: {}]
  %s11 = inlined_call_operand.hbm [shape: f32[2,128,128], index: 11, kind: output, shape index: {0}]
  %s12 = inlined_call_operand.hbm [shape: f32[2,128,128], index: 12, kind: output, shape index: {1}]
  %13 = xla_tuple %s11, %s12
  %s14 = sld [smem:[#allocation0]]
  $region117: #{tpu_custom_call.1} parent=0
    _
  %s16 = ssub.s32 1, %s14
  %s17 = scalar_select 0, %s16, %s14
  $region1: #{tpu_custom_call.1} parent=0
    #allocation4 [shape = 'u8[65536]{0}', space=vmem, size = 0x10000, scoped, tag = 'input window, operand 0']
    #allocation5 [shape = 's32[2]{0}', space=sflag, size = 0x8, scoped, tag = 'scoped memory for tpu_custom_call.1']
    #allocation6 [shape = 's32[2]{0}', space=sflag, size = 0x8, scoped, tag = 'scoped memory for tpu_custom_call.1']
    #allocation7 [shape = 'u8[65536]{0}', space=vmem, size = 0x10000, scoped, tag = 'input window, operand 1']
    #allocation8 [shape = 's32[2]{0}', space=sflag, size = 0x8, scoped, tag = 'scoped memory for tpu_custom_call.1']
    #allocation9 [shape = 'u8[65536]{0}', space=vmem, size = 0x10000, scoped, tag = 'input window, operand 2']
    #allocation10 [shape = 'u8[32768]{0}', space=vmem, size = 0x8000, scoped, tag = 'input window, operand 3, single buffered']
    #allocation11 [shape = 's32[1]{0}', space=sflag, size = 0x4, scoped, tag = 'scoped memory for tpu_custom_call.1']
    #allocation12 [shape = 'u8[32768]{0}', space=vmem, size = 0x8000, scoped, tag = 'input window, operand 5, single buffered']
    #allocation13 [shape = 'u8[32768]{0}', space=vmem, size = 0x8000, scoped, tag = 'input window, operand 7, single buffered']
    #allocation14 [shape = 's32[1]{0}', space=sflag, size = 0x4, scoped, tag = 'scoped memory for tpu_custom_call.1']
    #allocation15 [shape = 'u8[32768]{0}', space=vmem, size = 0x8000, scoped, tag = 'input window, operand 9, single buffered']
    #allocation16 [shape = 'u8[131072]{0}', space=vmem, size = 0x20000, scoped, tag = 'output window, operand 0']
    #allocation17 [shape = 'u8[131072]{0}', space=vmem, size = 0x20000, scoped, tag = 'output window, operand 1']
    #allocation18 [shape = 's32[2]{0}', space=sflag, size = 0x8, scoped, tag = 'scoped memory for tpu_custom_call.1']
    %18 = vsyncpa [#allocation5], 0
    %s19 = scalar_lea.sflag [#allocation5], 1
    %20 = vsyncpa %s19, 0
    %21 = vsyncpa [#allocation8], 0
    %s22 = scalar_lea.sflag [#allocation8], 1
    %23 = vsyncpa %s22, 0
    %24 = vsyncpa [#allocation11], 0
    %25 = vsyncpa [#allocation14], 0
    %26 = vsyncpa [#allocation6], 0
    %s27 = scalar_lea.sflag [#allocation6], 1
    %28 = vsyncpa %s27, 0
    %29 = vsyncpa [#allocation18], 0
    %s30 = scalar_lea.sflag [#allocation18], 1
    %31 = vsyncpa %s30, 0
    loop: start=0, step=1, limit=4
    $region2: #{tpu_custom_call.1} parent=1 // loop_pre_header
      _
    $region3: #{tpu_custom_call.1} parent=1 // loop_header
      %s33 = sphi 0, %s37
      %p34 = scmp.ge.s32.totalorder %s33, 4
      %s40 = sphi 0, %s52
      %s41 = sphi 0, %s48
      %s42 = sphi 0, %s40
      %s43 = sphi 0, %s41
      %s44 = sphi 0, %s42
      %s45 = sphi 0, %s43
      %s57 = sphi 0, %s59
      %s60 = sphi 0, %s57
      %s61 = sphi 0, %s60
      %s77 = sphi 0, %s61
      %s83 = sphi 0, %s85
      %s86 = sphi 0, %s83
      %s87 = sphi 0, %s86
      %s103 = sphi 0, %s87
      %s109 = sphi 0, %s111
      %s112 = sphi 0, %s109
      %s113 = sphi 0, %s112
      %s129 = sphi 0, %s113
      %s133 = sphi 0, %s133
      %s135 = sphi 0, %s133
      %s136 = sphi 0, %s135
      %s150 = sphi 0, %s136
      %s154 = sphi 0, %s154
      %s156 = sphi 0, %s154
      %s157 = sphi 0, %s156
      %s171 = sphi 0, %s157
      %s175 = sphi 0, %s175
      %s177 = sphi 0, %s175
      %s178 = sphi 0, %s177
      %s192 = sphi 0, %s178
      %s196 = sphi 0, %s196
      %s198 = sphi 0, %s196
      %s199 = sphi 0, %s198
      %s213 = sphi 0, %s199
      %s217 = sphi 0, %s217
      %s219 = sphi 0, %s217
      %s220 = sphi 0, %s219
      %s234 = sphi 0, %s220
      %s238 = sphi 0, %s238
      %s240 = sphi 0, %s238
      %s241 = sphi 0, %s240
      %s255 = sphi 0, %s241
      %s259 = sphi 0, %s259
      %s261 = sphi 0, %s259
      %s262 = sphi 0, %s261
      %s276 = sphi 0, %s262
      %s280 = sphi 0, %s280
      %s282 = sphi 0, %s280
      %s283 = sphi 0, %s282
      %s297 = sphi 0, %s283
      %s305 = sphi 0, %s307
      %s308 = sphi 0, %s305
      %s309 = sphi 0, %s308
      %s325 = sphi 0, %s309
      %s333 = sphi 0, %s335
      %s336 = sphi 0, %s333
      %s337 = sphi 0, %s336
      %s353 = sphi 0, %s337
    $region4: #{tpu_custom_call.1} parent=1 // loop_header_branch
      %36 = sbr.rel (%p34) target = $region8
    $region5: #{tpu_custom_call.1} parent=1 // loop_body
      %s38 = ssub.s32 %s33, 1
      %s39 = ssub.s32 %s33, 2
      %s46 = sadd.s32 1, %s41
      %p47 = scmp.ge.s32.totalorder %s46, 1
      %s48 = scalar_select %p47, 0, %s46
      %s49 = sadd.s32 1, %s40
      %s50 = scalar_select %p47, %s49, %s40
      %p51 = scmp.ge.s32.totalorder %s50, 2
      %s52 = scalar_select %p51, 0, %s50
      %s53 = ssub.s32 %s40, %s52
      %s54 = ssub.s32 %s41, %s48
      %s55 = sor.u32 %s53, %s54
      %p56 = scmp.eq.s32.totalorder %s55, 0
      %s58 = sadd.s32 %s57, 1
      %s59 = scalar_select %p56, %s57, %s58
      %p62 = pneg %p56
      %p63 = scmp.eq.s32.totalorder %s33, 1
      %p64 = por %p62, %p63
      %p65 = scmp.ne.s32.totalorder %s57, %s60
      %p66 = scmp.eq.s32.totalorder %s33, 0
      %p67 = por %p65, %p66
      %p68 = scmp.ne.s32.totalorder %s57, %s60
      %p69 = scmp.eq.s32.totalorder %s38, 1
      %p70 = por %p68, %p69
      %p71 = scmp.ne.s32.totalorder %s60, %s61
      %p72 = scmp.eq.s32.totalorder %s38, 0
      %p73 = por %p71, %p72
      %p74 = scmp.ne.s32.totalorder %s60, %s61
      %p75 = scmp.eq.s32.totalorder %s39, 1
      %p76 = por %p74, %p75
      %p78 = scmp.ne.s32.totalorder %s61, %s77
      %p79 = scmp.eq.s32.totalorder %s39, 0
      %p80 = por %p78, %p79
      %s81 = ssub.s32 %s40, %s52
      %p82 = scmp.eq.s32.totalorder %s81, 0
      %s84 = sadd.s32 %s83, 1
      %s85 = scalar_select %p82, %s83, %s84
      %p88 = pneg %p82
      %p89 = scmp.eq.s32.totalorder %s33, 1
      %p90 = por %p88, %p89
      %p91 = scmp.ne.s32.totalorder %s83, %s86
      %p92 = scmp.eq.s32.totalorder %s33, 0
      %p93 = por %p91, %p92
      %p94 = scmp.ne.s32.totalorder %s83, %s86
      %p95 = scmp.eq.s32.totalorder %s38, 1
      %p96 = por %p94, %p95
      %p97 = scmp.ne.s32.totalorder %s86, %s87
      %p98 = scmp.eq.s32.totalorder %s38, 0
      %p99 = por %p97, %p98
      %p100 = scmp.ne.s32.totalorder %s86, %s87
      %p101 = scmp.eq.s32.totalorder %s39, 1
      %p102 = por %p100, %p101
      %p104 = scmp.ne.s32.totalorder %s87, %s103
      %p105 = scmp.eq.s32.totalorder %s39, 0
      %p106 = por %p104, %p105
      %s107 = ssub.s32 %s40, %s52
      %p108 = scmp.eq.s32.totalorder %s107, 0
      %s110 = sadd.s32 %s109, 1
      %s111 = scalar_select %p108, %s109, %s110
      %p114 = pneg %p108
      %p115 = scmp.eq.s32.totalorder %s33, 1
      %p116 = por %p114, %p115
      %p117 = scmp.ne.s32.totalorder %s109, %s112
      %p118 = scmp.eq.s32.totalorder %s33, 0
      %p119 = por %p117, %p118
      %p120 = scmp.ne.s32.totalorder %s109, %s112
      %p121 = scmp.eq.s32.totalorder %s38, 1
      %p122 = por %p120, %p121
      %p123 = scmp.ne.s32.totalorder %s112, %s113
      %p124 = scmp.eq.s32.totalorder %s38, 0
      %p125 = por %p123, %p124
      %p126 = scmp.ne.s32.totalorder %s112, %s113
      %p127 = scmp.eq.s32.totalorder %s39, 1
      %p128 = por %p126, %p127
      %p130 = scmp.ne.s32.totalorder %s113, %s129
      %p131 = scmp.eq.s32.totalorder %s39, 0
      %p132 = por %p130, %p131
      %s134 = sadd.s32 %s133, 1
      %p137 = scmp.eq.s32.totalorder %s33, 1
      %p138 = scmp.ne.s32.totalorder %s133, %s135
      %p139 = scmp.eq.s32.totalorder %s33, 0
      %p140 = por %p138, %p139
      %p141 = scmp.ne.s32.totalorder %s133, %s135
      %p142 = scmp.eq.s32.totalorder %s38, 1
      %p143 = por %p141, %p142
      %p144 = scmp.ne.s32.totalorder %s135, %s136
      %p145 = scmp.eq.s32.totalorder %s38, 0
      %p146 = por %p144, %p145
      %p147 = scmp.ne.s32.totalorder %s135, %s136
      %p148 = scmp.eq.s32.totalorder %s39, 1
      %p149 = por %p147, %p148
      %p151 = scmp.ne.s32.totalorder %s136, %s150
      %p152 = scmp.eq.s32.totalorder %s39, 0
      %p153 = por %p151, %p152
      %s155 = sadd.s32 %s154, 1
      %p158 = scmp.eq.s32.totalorder %s33, 1
      %p159 = scmp.ne.s32.totalorder %s154, %s156
      %p160 = scmp.eq.s32.totalorder %s33, 0
      %p161 = por %p159, %p160
      %p162 = scmp.ne.s32.totalorder %s154, %s156
      %p163 = scmp.eq.s32.totalorder %s38, 1
      %p164 = por %p162, %p163
      %p165 = scmp.ne.s32.totalorder %s156, %s157
      %p166 = scmp.eq.s32.totalorder %s38, 0
      %p167 = por %p165, %p166
      %p168 = scmp.ne.s32.totalorder %s156, %s157
      %p169 = scmp.eq.s32.totalorder %s39, 1
      %p170 = por %p168, %p169
      %p172 = scmp.ne.s32.totalorder %s157, %s171
      %p173 = scmp.eq.s32.totalorder %s39, 0
      %p174 = por %p172, %p173
      %s176 = sadd.s32 %s175, 1
      %p179 = scmp.eq.s32.totalorder %s33, 1
      %p180 = scmp.ne.s32.totalorder %s175, %s177
      %p181 = scmp.eq.s32.totalorder %s33, 0
      %p182 = por %p180, %p181
      %p183 = scmp.ne.s32.totalorder %s175, %s177
      %p184 = scmp.eq.s32.totalorder %s38, 1
      %p185 = por %p183, %p184
      %p186 = scmp.ne.s32.totalorder %s177, %s178
      %p187 = scmp.eq.s32.totalorder %s38, 0
      %p188 = por %p186, %p187
      %p189 = scmp.ne.s32.totalorder %s177, %s178
      %p190 = scmp.eq.s32.totalorder %s39, 1
      %p191 = por %p189, %p190
      %p193 = scmp.ne.s32.totalorder %s178, %s192
      %p194 = scmp.eq.s32.totalorder %s39, 0
      %p195 = por %p193, %p194
      %s197 = sadd.s32 %s196, 1
      %p200 = scmp.eq.s32.totalorder %s33, 1
      %p201 = scmp.ne.s32.totalorder %s196, %s198
      %p202 = scmp.eq.s32.totalorder %s33, 0
      %p203 = por %p201, %p202
      %p204 = scmp.ne.s32.totalorder %s196, %s198
      %p205 = scmp.eq.s32.totalorder %s38, 1
      %p206 = por %p204, %p205
      %p207 = scmp.ne.s32.totalorder %s198, %s199
      %p208 = scmp.eq.s32.totalorder %s38, 0
      %p209 = por %p207, %p208
      %p210 = scmp.ne.s32.totalorder %s198, %s199
      %p211 = scmp.eq.s32.totalorder %s39, 1
      %p212 = por %p210, %p211
      %p214 = scmp.ne.s32.totalorder %s199, %s213
      %p215 = scmp.eq.s32.totalorder %s39, 0
      %p216 = por %p214, %p215
      %s218 = sadd.s32 %s217, 1
      %p221 = scmp.eq.s32.totalorder %s33, 1
      %p222 = scmp.ne.s32.totalorder %s217, %s219
      %p223 = scmp.eq.s32.totalorder %s33, 0
      %p224 = por %p222, %p223
      %p225 = scmp.ne.s32.totalorder %s217, %s219
      %p226 = scmp.eq.s32.totalorder %s38, 1
      %p227 = por %p225, %p226
      %p228 = scmp.ne.s32.totalorder %s219, %s220
      %p229 = scmp.eq.s32.totalorder %s38, 0
      %p230 = por %p228, %p229
      %p231 = scmp.ne.s32.totalorder %s219, %s220
      %p232 = scmp.eq.s32.totalorder %s39, 1
      %p233 = por %p231, %p232
      %p235 = scmp.ne.s32.totalorder %s220, %s234
      %p236 = scmp.eq.s32.totalorder %s39, 0
      %p237 = por %p235, %p236
      %s239 = sadd.s32 %s238, 1
      %p242 = scmp.eq.s32.totalorder %s33, 1
      %p243 = scmp.ne.s32.totalorder %s238, %s240
      %p244 = scmp.eq.s32.totalorder %s33, 0
      %p245 = por %p243, %p244
      %p246 = scmp.ne.s32.totalorder %s238, %s240
      %p247 = scmp.eq.s32.totalorder %s38, 1
      %p248 = por %p246, %p247
      %p249 = scmp.ne.s32.totalorder %s240, %s241
      %p250 = scmp.eq.s32.totalorder %s38, 0
      %p251 = por %p249, %p250
      %p252 = scmp.ne.s32.totalorder %s240, %s241
      %p253 = scmp.eq.s32.totalorder %s39, 1
      %p254 = por %p252, %p253
      %p256 = scmp.ne.s32.totalorder %s241, %s255
      %p257 = scmp.eq.s32.totalorder %s39, 0
      %p258 = por %p256, %p257
      %s260 = sadd.s32 %s259, 1
      %p263 = scmp.eq.s32.totalorder %s33, 1
      %p264 = scmp.ne.s32.totalorder %s259, %s261
      %p265 = scmp.eq.s32.totalorder %s33, 0
      %p266 = por %p264, %p265
      %p267 = scmp.ne.s32.totalorder %s259, %s261
      %p268 = scmp.eq.s32.totalorder %s38, 1
      %p269 = por %p267, %p268
      %p270 = scmp.ne.s32.totalorder %s261, %s262
      %p271 = scmp.eq.s32.totalorder %s38, 0
      %p272 = por %p270, %p271
      %p273 = scmp.ne.s32.totalorder %s261, %s262
      %p274 = scmp.eq.s32.totalorder %s39, 1
      %p275 = por %p273, %p274
      %p277 = scmp.ne.s32.totalorder %s262, %s276
      %p278 = scmp.eq.s32.totalorder %s39, 0
      %p279 = por %p277, %p278
      %s281 = sadd.s32 %s280, 1
      %p284 = scmp.eq.s32.totalorder %s33, 1
      %p285 = scmp.ne.s32.totalorder %s280, %s282
      %p286 = scmp.eq.s32.totalorder %s33, 0
      %p287 = por %p285, %p286
      %p288 = scmp.ne.s32.totalorder %s280, %s282
      %p289 = scmp.eq.s32.totalorder %s38, 1
      %p290 = por %p288, %p289
      %p291 = scmp.ne.s32.totalorder %s282, %s283
      %p292 = scmp.eq.s32.totalorder %s38, 0
      %p293 = por %p291, %p292
      %p294 = scmp.ne.s32.totalorder %s282, %s283
      %p295 = scmp.eq.s32.totalorder %s39, 1
      %p296 = por %p294, %p295
      %p298 = scmp.ne.s32.totalorder %s283, %s297
      %p299 = scmp.eq.s32.totalorder %s39, 0
      %p300 = por %p298, %p299
      %s301 = ssub.s32 %s40, %s52
      %s302 = ssub.s32 %s41, %s48
      %s303 = sor.u32 %s301, %s302
      %p304 = scmp.eq.s32.totalorder %s303, 0
      %s306 = sadd.s32 %s305, 1
      %s307 = scalar_select %p304, %s305, %s306
      %p310 = pneg %p304
      %p311 = scmp.eq.s32.totalorder %s33, 1
      %p312 = por %p310, %p311
      %p313 = scmp.ne.s32.totalorder %s305, %s308
      %p314 = scmp.eq.s32.totalorder %s33, 0
      %p315 = por %p313, %p314
      %p316 = scmp.ne.s32.totalorder %s305, %s308
      %p317 = scmp.eq.s32.totalorder %s38, 1
      %p318 = por %p316, %p317
      %p319 = scmp.ne.s32.totalorder %s308, %s309
      %p320 = scmp.eq.s32.totalorder %s38, 0
      %p321 = por %p319, %p320
      %p322 = scmp.ne.s32.totalorder %s308, %s309
      %p323 = scmp.eq.s32.totalorder %s39, 1
      %p324 = por %p322, %p323
      %p326 = scmp.ne.s32.totalorder %s309, %s325
      %p327 = scmp.eq.s32.totalorder %s39, 0
      %p328 = por %p326, %p327
      %s329 = ssub.s32 %s40, %s52
      %s330 = ssub.s32 %s41, %s48
      %s331 = sor.u32 %s329, %s330
      %p332 = scmp.eq.s32.totalorder %s331, 0
      %s334 = sadd.s32 %s333, 1
      %s335 = scalar_select %p332, %s333, %s334
      %p338 = pneg %p332
      %p339 = scmp.eq.s32.totalorder %s33, 1
      %p340 = por %p338, %p339
      %p341 = scmp.ne.s32.totalorder %s333, %s336
      %p342 = scmp.eq.s32.totalorder %s33, 0
      %p343 = por %p341, %p342
      %p344 = scmp.ne.s32.totalorder %s333, %s336
      %p345 = scmp.eq.s32.totalorder %s38, 1
      %p346 = por %p344, %p345
      %p347 = scmp.ne.s32.totalorder %s336, %s337
      %p348 = scmp.eq.s32.totalorder %s38, 0
      %p349 = por %p347, %p348
      %p350 = scmp.ne.s32.totalorder %s336, %s337
      %p351 = scmp.eq.s32.totalorder %s39, 1
      %p352 = por %p350, %p351
      %p354 = scmp.ne.s32.totalorder %s337, %s353
      %p355 = scmp.eq.s32.totalorder %s39, 0
      %p356 = por %p354, %p355
      %p357 = scmp.le.s32.totalorder 1, %s33
      %p358 = scmp.lt.s32.totalorder %s33, 3
      %p359 = pnand %p357, %p358
      %p360 = pneg %p359
      // Predicated region
      $region9: #{tpu_custom_call.1} parent=5 // pred_check
        _
      $region10: #{tpu_custom_call.1} parent=5 // pred_check_branch
        %362 = sbr.rel (%p359) target = $region12
      $region11: #{tpu_custom_call.1} parent=5 // pred_region
        %s363 = ssub.s32 %s33, 1
        // Predicated region
        $region13: #{tpu_custom_call.1} parent=11 // pred_check
          %p364 = pneg %p146
        $region14: #{tpu_custom_call.1} parent=11 // pred_check_branch
          %366 = sbr.rel (%p364) target = $region16
        $region15: #{tpu_custom_call.1} parent=11 // pred_region
          %s368 = ssub.s32 1024, 1024
          %369 = vsyncadd [#allocation11], %s368
          %s370 = sshll.u32 [#allocation10], 4
          %s371 = int_to_ptr.vmem [resolvable:$true] %s370
          %376 = dma.hbm_to_vmem [thread:$0]  %s3, 1024, %s371, [#allocation11], 64, 64, 4
        $region16: #{tpu_custom_call.1} parent=11 // pred_fallthru
          _
        // Predicated region
        $region17: #{tpu_custom_call.1} parent=11 // pred_check
          %p377 = pneg %p167
        $region18: #{tpu_custom_call.1} parent=11 // pred_check_branch
          %379 = sbr.rel (%p377) target = $region20
        $region19: #{tpu_custom_call.1} parent=11 // pred_region
          _
        $region20: #{tpu_custom_call.1} parent=11 // pred_fallthru
          _
        // Predicated region
        $region21: #{tpu_custom_call.1} parent=11 // pred_check
          %p380 = pneg %p188
        $region22: #{tpu_custom_call.1} parent=11 // pred_check_branch
          %382 = sbr.rel (%p380) target = $region24
        $region23: #{tpu_custom_call.1} parent=11 // pred_region
          %s384 = ssub.s32 1024, 1024
          %385 = vsyncadd [#allocation11], %s384
          %s386 = sshll.u32 [#allocation12], 4
          %s387 = int_to_ptr.vmem [resolvable:$true] %s386
          %392 = dma.hbm_to_vmem [thread:$0]  %s5, 1024, %s387, [#allocation11], 64, 64, 4
        $region24: #{tpu_custom_call.1} parent=11 // pred_fallthru
          _
        // Predicated region
        $region25: #{tpu_custom_call.1} parent=11 // pred_check
          %p393 = pneg %p209
        $region26: #{tpu_custom_call.1} parent=11 // pred_check_branch
          %395 = sbr.rel (%p393) target = $region28
        $region27: #{tpu_custom_call.1} parent=11 // pred_region
          _
        $region28: #{tpu_custom_call.1} parent=11 // pred_fallthru
          _
        // Predicated region
        $region29: #{tpu_custom_call.1} parent=11 // pred_check
          %p396 = pneg %p230
        $region30: #{tpu_custom_call.1} parent=11 // pred_check_branch
          %398 = sbr.rel (%p396) target = $region32
        $region31: #{tpu_custom_call.1} parent=11 // pred_region
          %s400 = ssub.s32 1024, 1024
          %401 = vsyncadd [#allocation14], %s400
          %s402 = sshll.u32 [#allocation13], 4
          %s403 = int_to_ptr.vmem [resolvable:$true] %s402
          %408 = dma.hbm_to_vmem [thread:$0]  %s7, 1024, %s403, [#allocation14], 64, 64, 4
        $region32: #{tpu_custom_call.1} parent=11 // pred_fallthru
          _
        // Predicated region
        $region33: #{tpu_custom_call.1} parent=11 // pred_check
          %p409 = pneg %p251
        $region34: #{tpu_custom_call.1} parent=11 // pred_check_branch
          %411 = sbr.rel (%p409) target = $region36
        $region35: #{tpu_custom_call.1} parent=11 // pred_region
          _
        $region36: #{tpu_custom_call.1} parent=11 // pred_fallthru
          _
        // Predicated region
        $region37: #{tpu_custom_call.1} parent=11 // pred_check
          %p412 = pneg %p272
        $region38: #{tpu_custom_call.1} parent=11 // pred_check_branch
          %414 = sbr.rel (%p412) target = $region40
        $region39: #{tpu_custom_call.1} parent=11 // pred_region
          %s416 = ssub.s32 1024, 1024
          %417 = vsyncadd [#allocation14], %s416
          %s418 = sshll.u32 [#allocation15], 4
          %s419 = int_to_ptr.vmem [resolvable:$true] %s418
          %424 = dma.hbm_to_vmem [thread:$0]  %s9, 1024, %s419, [#allocation14], 64, 64, 4
        $region40: #{tpu_custom_call.1} parent=11 // pred_fallthru
          _
        // Predicated region
        $region41: #{tpu_custom_call.1} parent=11 // pred_check
          %p425 = pneg %p293
        $region42: #{tpu_custom_call.1} parent=11 // pred_check_branch
          %427 = sbr.rel (%p425) target = $region44
        $region43: #{tpu_custom_call.1} parent=11 // pred_region
          _
        $region44: #{tpu_custom_call.1} parent=11 // pred_fallthru
          _
      $region12: #{tpu_custom_call.1} parent=5 // pred_fallthru
        _
      %p428 = scmp.lt.s32.totalorder %s33, 2
      // Predicated region
      $region45: #{tpu_custom_call.1} parent=5 // pred_check
        %p429 = pneg %p428
      $region46: #{tpu_custom_call.1} parent=5 // pred_check_branch
        %431 = sbr.rel (%p429) target = $region48
      $region47: #{tpu_custom_call.1} parent=5 // pred_region
        // Predicated region
        $region49: #{tpu_custom_call.1} parent=47 // pred_check
          %p432 = pneg %p67
        $region50: #{tpu_custom_call.1} parent=47 // pred_check_branch
          %434 = sbr.rel (%p432) target = $region52
        $region51: #{tpu_custom_call.1} parent=47 // pred_region
          %s435 = sand.u32 %s57, 1
          %s436 = scalar_lea.sflag [#allocation5], %s435
          %s437 = sand.u32 %s57, 1
          %s438 = smul.addr %s437, 64
          %s439 = scalar_lea.vmem [#allocation4], %s438
          %s440 = smul.u32 16, %s41
          %s442 = ssub.s32 1024, 1024
          %443 = vsyncadd %s436, %s442
          %s444 = smul.addr %s40, 16
          %s445 = sadd.s32 %s440, %s444
          %s446 = smul.addr %s445, 64
          %s447 = scalar_lea.hbm %s0, %s446
          %s448 = sshll.u32 %s439, 4
          %s449 = int_to_ptr.vmem [resolvable:$true] %s448
          %454 = dma.hbm_to_vmem [thread:$0]  %s447, 1024, %s449, %s436, 64, 64, 4
        $region52: #{tpu_custom_call.1} parent=47 // pred_fallthru
          _
        // Predicated region
        $region53: #{tpu_custom_call.1} parent=47 // pred_check
          %p455 = pneg %p93
        $region54: #{tpu_custom_call.1} parent=47 // pred_check_branch
          %457 = sbr.rel (%p455) target = $region56
        $region55: #{tpu_custom_call.1} parent=47 // pred_region
          %s458 = sand.u32 %s33, 1
          %s459 = scalar_lea.sflag [#allocation8], %s458
          %s460 = sand.u32 %s83, 1
          %s461 = smul.addr %s460, 64
          %s462 = scalar_lea.vmem [#allocation7], %s461
          %s464 = ssub.s32 1024, 1024
          %465 = vsyncadd %s459, %s464
          %s466 = smul.addr %s40, 16
          %s467 = smul.addr %s466, 64
          %s468 = scalar_lea.hbm %s1, %s467
          %s469 = sshll.u32 %s462, 4
          %s470 = int_to_ptr.vmem [resolvable:$true] %s469
          %475 = dma.hbm_to_vmem [thread:$0]  %s468, 1024, %s470, %s459, 64, 64, 4
        $region56: #{tpu_custom_call.1} parent=47 // pred_fallthru
          _
        // Predicated region
        $region57: #{tpu_custom_call.1} parent=47 // pred_check
          %p476 = pneg %p119
        $region58: #{tpu_custom_call.1} parent=47 // pred_check_branch
          %478 = sbr.rel (%p476) target = $region60
        $region59: #{tpu_custom_call.1} parent=47 // pred_region
          %s479 = sand.u32 %s33, 1
          %s480 = scalar_lea.sflag [#allocation8], %s479
          %s481 = sand.u32 %s109, 1
          %s482 = smul.addr %s481, 64
          %s483 = scalar_lea.vmem [#allocation9], %s482
          %s485 = ssub.s32 1024, 1024
          %486 = vsyncadd %s480, %s485
          %s487 = smul.addr %s40, 16
          %s488 = smul.addr %s487, 64
          %s489 = scalar_lea.hbm %s2, %s488
          %s490 = sshll.u32 %s483, 4
          %s491 = int_to_ptr.vmem [resolvable:$true] %s490
          %496 = dma.hbm_to_vmem [thread:$0]  %s489, 1024, %s491, %s480, 64, 64, 4
        $region60: #{tpu_custom_call.1} parent=47 // pred_fallthru
          _
      $region48: #{tpu_custom_call.1} parent=5 // pred_fallthru
        _
      %p497 = scmp.le.s32.totalorder 1, %s33
      %p498 = scmp.lt.s32.totalorder %s33, 3
      %p499 = pnand %p497, %p498
      %p500 = pneg %p499
      // Predicated region
      $region61: #{tpu_custom_call.1} parent=5 // pred_check
        _
      $region62: #{tpu_custom_call.1} parent=5 // pred_check_branch
        %502 = sbr.rel (%p499) target = $region64
      $region63: #{tpu_custom_call.1} parent=5 // pred_region
        %s503 = ssub.s32 %s33, 1
        %s504 = sand.u32 %s60, 1
        %s505 = scalar_lea.sflag [#allocation5], %s504
        %s506 = sand.u32 %s60, 1
        %s507 = smul.addr %s506, 64
        %s508 = scalar_lea.vmem [#allocation4], %s507
        // Predicated region
        $region65: #{tpu_custom_call.1} parent=63 // pred_check
          %p509 = pneg %p73
        $region66: #{tpu_custom_call.1} parent=63 // pred_check_branch
          %511 = sbr.rel (%p509) target = $region68
        $region67: #{tpu_custom_call.1} parent=63 // pred_region
          %512 = dma.done %s505, 1024
        $region68: #{tpu_custom_call.1} parent=63 // pred_fallthru
          _
        %s513 = sand.u32 %s38, 1
        %s514 = scalar_lea.sflag [#allocation8], %s513
        %s515 = sand.u32 %s86, 1
        %s516 = smul.addr %s515, 64
        %s517 = scalar_lea.vmem [#allocation7], %s516
        // Predicated region
        $region69: #{tpu_custom_call.1} parent=63 // pred_check
          %p518 = pneg %p99
        $region70: #{tpu_custom_call.1} parent=63 // pred_check_branch
          %520 = sbr.rel (%p518) target = $region72
        $region71: #{tpu_custom_call.1} parent=63 // pred_region
          %521 = dma.done %s514, 1024
        $region72: #{tpu_custom_call.1} parent=63 // pred_fallthru
          _
        %s522 = sand.u32 %s38, 1
        %s523 = scalar_lea.sflag [#allocation8], %s522
        %s524 = sand.u32 %s112, 1
        %s525 = smul.addr %s524, 64
        %s526 = scalar_lea.vmem [#allocation9], %s525
        // Predicated region
        $region73: #{tpu_custom_call.1} parent=63 // pred_check
          %p527 = pneg %p125
        $region74: #{tpu_custom_call.1} parent=63 // pred_check_branch
          %529 = sbr.rel (%p527) target = $region76
        $region75: #{tpu_custom_call.1} parent=63 // pred_region
          %530 = dma.done %s523, 1024
        $region76: #{tpu_custom_call.1} parent=63 // pred_fallthru
          _
        // Predicated region
        $region77: #{tpu_custom_call.1} parent=63 // pred_check
          %p531 = pneg %p146
        $region78: #{tpu_custom_call.1} parent=63 // pred_check_branch
          %533 = sbr.rel (%p531) target = $region80
        $region79: #{tpu_custom_call.1} parent=63 // pred_region
          %534 = dma.done [#allocation11], 1024
        $region80: #{tpu_custom_call.1} parent=63 // pred_fallthru
          _
        // Predicated region
        $region81: #{tpu_custom_call.1} parent=63 // pred_check
          %p535 = pneg %p188
        $region82: #{tpu_custom_call.1} parent=63 // pred_check_branch
          %537 = sbr.rel (%p535) target = $region84
        $region83: #{tpu_custom_call.1} parent=63 // pred_region
          %538 = dma.done [#allocation11], 1024
        $region84: #{tpu_custom_call.1} parent=63 // pred_fallthru
          _
        // Predicated region
        $region85: #{tpu_custom_call.1} parent=63 // pred_check
          %p539 = pneg %p230
        $region86: #{tpu_custom_call.1} parent=63 // pred_check_branch
          %541 = sbr.rel (%p539) target = $region88
        $region87: #{tpu_custom_call.1} parent=63 // pred_region
          %542 = dma.done [#allocation14], 1024
        $region88: #{tpu_custom_call.1} parent=63 // pred_fallthru
          _
        // Predicated region
        $region89: #{tpu_custom_call.1} parent=63 // pred_check
          %p543 = pneg %p272
        $region90: #{tpu_custom_call.1} parent=63 // pred_check_branch
          %545 = sbr.rel (%p543) target = $region92
        $region91: #{tpu_custom_call.1} parent=63 // pred_region
          %546 = dma.done [#allocation14], 1024
        $region92: #{tpu_custom_call.1} parent=63 // pred_fallthru
          _
        %s547 = sand.u32 %s60, 1
        %s548 = scalar_lea.sflag [#allocation5], %s547
        %s549 = sand.u32 %s60, 1
        %s550 = smul.addr %s549, 64
        %s551 = scalar_lea.vmem [#allocation4], %s550
        %p552 = pneg %p73
        %p553 = pneg %p70
        %s554 = sand.u32 %s38, 1
        %s555 = scalar_lea.sflag [#allocation8], %s554
        %s556 = sand.u32 %s86, 1
        %s557 = smul.addr %s556, 64
        %s558 = scalar_lea.vmem [#allocation7], %s557
        %p559 = pneg %p99
        %p560 = pneg %p96
        %s561 = sand.u32 %s38, 1
        %s562 = scalar_lea.sflag [#allocation8], %s561
        %s563 = sand.u32 %s112, 1
        %s564 = smul.addr %s563, 64
        %s565 = scalar_lea.vmem [#allocation9], %s564
        %p566 = pneg %p125
        %p567 = pneg %p122
        %p568 = pneg %p146
        %p569 = pneg %p143
        %p570 = pneg %p167
        %p571 = pneg %p164
        %p572 = pneg %p188
        %p573 = pneg %p185
        %p574 = pneg %p209
        %p575 = pneg %p206
        %p576 = pneg %p230
        %p577 = pneg %p227
        %p578 = pneg %p251
        %p579 = pneg %p248
        %p580 = pneg %p272
        %p581 = pneg %p269
        %p582 = pneg %p293
        %p583 = pneg %p290
        %p584 = pneg %p321
        %p585 = pneg %p318
        %s586 = sand.u32 %s308, 1
        %s587 = scalar_lea.sflag [#allocation6], %s586
        %s588 = sand.u32 %s308, 1
        %s589 = smul.addr %s588, 128
        %s590 = scalar_lea.vmem [#allocation16], %s589
        %p591 = pneg %p349
        %p592 = pneg %p346
        %s593 = sand.u32 %s336, 1
        %s594 = scalar_lea.sflag [#allocation18], %s593
        %s595 = sand.u32 %s336, 1
        %s596 = smul.addr %s595, 128
        %s597 = scalar_lea.vmem [#allocation17], %s596
        %s598 = smul.u32 16, %s43
        %s599 = smul.u32 16, %s43
        %s600 = smul.u32 16, %s43
        %p602 = scmp.eq.s32.totalorder %s43, 0
        // Predicated region
        $region93: #{tpu_custom_call.1} parent=63 // pred_check
          %p603 = pneg %p602
        $region94: #{tpu_custom_call.1} parent=63 // pred_check_branch
          %605 = sbr.rel (%p603) target = $region96
        $region95: #{tpu_custom_call.1} parent=63 // pred_region
          %v606 = vld [vmem:[%s517] sm:$0xf]
          %v607 = vld [vmem:[%s517 + $0x4] sm:$0xf]
          %v608 = vld [vmem:[%s517 + $0x8] sm:$0xf]
          %v609 = vld [vmem:[%s517 + $0xc] sm:$0xf]
          %v610 = vld [vmem:[%s517 + $0x10] sm:$0xf]
          %v611 = vld [vmem:[%s517 + $0x14] sm:$0xf]
          %v612 = vld [vmem:[%s517 + $0x18] sm:$0xf]
          %v613 = vld [vmem:[%s517 + $0x1c] sm:$0xf]
          %v614 = vld [vmem:[%s517 + $0x20] sm:$0xf]
          %v615 = vld [vmem:[%s517 + $0x24] sm:$0xf]
          %v616 = vld [vmem:[%s517 + $0x28] sm:$0xf]
          %v617 = vld [vmem:[%s517 + $0x2c] sm:$0xf]
          %v618 = vld [vmem:[%s517 + $0x30] sm:$0xf]
          %v619 = vld [vmem:[%s517 + $0x34] sm:$0xf]
          %v620 = vld [vmem:[%s517 + $0x38] sm:$0xf]
          %v621 = vld [vmem:[%s517 + $0x3c] sm:$0xf]
          %v622 = vld [vmem:[%s526] sm:$0xf]
          %v623 = vld [vmem:[%s526 + $0x4] sm:$0xf]
          %v624 = vld [vmem:[%s526 + $0x8] sm:$0xf]
          %v625 = vld [vmem:[%s526 + $0xc] sm:$0xf]
          %v626 = vld [vmem:[%s526 + $0x10] sm:$0xf]
          %v627 = vld [vmem:[%s526 + $0x14] sm:$0xf]
          %v628 = vld [vmem:[%s526 + $0x18] sm:$0xf]
          %v629 = vld [vmem:[%s526 + $0x1c] sm:$0xf]
          %v630 = vld [vmem:[%s526 + $0x20] sm:$0xf]
          %v631 = vld [vmem:[%s526 + $0x24] sm:$0xf]
          %v632 = vld [vmem:[%s526 + $0x28] sm:$0xf]
          %v633 = vld [vmem:[%s526 + $0x2c] sm:$0xf]
          %v634 = vld [vmem:[%s526 + $0x30] sm:$0xf]
          %v635 = vld [vmem:[%s526 + $0x34] sm:$0xf]
          %v636 = vld [vmem:[%s526 + $0x38] sm:$0xf]
          %v637 = vld [vmem:[%s526 + $0x3c] sm:$0xf]
          %v638 = vld [vmem:[#allocation12] sm:$0xf]
          %v639 = vld [vmem:[#allocation12 + $0x4] sm:$0xf]
          %v640 = vld [vmem:[#allocation12 + $0x8] sm:$0xf]
          %v641 = vld [vmem:[#allocation12 + $0xc] sm:$0xf]
          %v642 = vld [vmem:[#allocation12 + $0x10] sm:$0xf]
          %v643 = vld [vmem:[#allocation12 + $0x14] sm:$0xf]
          %v644 = vld [vmem:[#allocation12 + $0x18] sm:$0xf]
          %v645 = vld [vmem:[#allocation12 + $0x1c] sm:$0xf]
          %v646 = vld [vmem:[#allocation12 + $0x20] sm:$0xf]
          %v647 = vld [vmem:[#allocation12 + $0x24] sm:$0xf]
          %v648 = vld [vmem:[#allocation12 + $0x28] sm:$0xf]
          %v649 = vld [vmem:[#allocation12 + $0x2c] sm:$0xf]
          %v650 = vld [vmem:[#allocation12 + $0x30] sm:$0xf]
          %v651 = vld [vmem:[#allocation12 + $0x34] sm:$0xf]
          %v652 = vld [vmem:[#allocation12 + $0x38] sm:$0xf]
          %v653 = vld [vmem:[#allocation12 + $0x3c] sm:$0xf]
          %v654 = vld [vmem:[%s6] sm:$0x1]
          %v656 = vlaneseq
          %v657 = vshrl.u32 %v656, 7
          %v658 = vsub.s32 0, %v657
          %v659 = vrot.slane %v654, %v658
          %v677 = vunpack.c.l.b16 %v606
          %v678 = vunpack.c.l.b16 %v607
          %v679 = vunpack.c.l.b16 %v608
          %v680 = vunpack.c.l.b16 %v609
          %v681 = vunpack.c.l.b16 %v610
          %v682 = vunpack.c.l.b16 %v611
          %v683 = vunpack.c.l.b16 %v612
          %v684 = vunpack.c.l.b16 %v613
          %v685 = vunpack.c.l.b16 %v614
          %v686 = vunpack.c.l.b16 %v615
          %v687 = vunpack.c.l.b16 %v616
          %v688 = vunpack.c.l.b16 %v617
          %v689 = vunpack.c.l.b16 %v618
          %v690 = vunpack.c.l.b16 %v619
          %v691 = vunpack.c.l.b16 %v620
          %v692 = vunpack.c.l.b16 %v621
          %v693 = vpack.c.b16 %v678, %v677
          %v694 = vpack.c.b16 %v680, %v679
          %v695 = vpack.c.b16 %v682, %v681
          %v696 = vpack.c.b16 %v684, %v683
          %v697 = vpack.c.b16 %v686, %v685
          %v698 = vpack.c.b16 %v688, %v687
          %v699 = vpack.c.b16 %v690, %v689
          %v700 = vpack.c.b16 %v692, %v691
          %v725 = vunpack.c.l.b16 %v638
          %v726 = vunpack.c.l.b16 %v639
          %v727 = vunpack.c.l.b16 %v640
          %v728 = vunpack.c.l.b16 %v641
          %v729 = vunpack.c.l.b16 %v642
          %v730 = vunpack.c.l.b16 %v643
          %v731 = vunpack.c.l.b16 %v644
          %v732 = vunpack.c.l.b16 %v645
          %v733 = vunpack.c.l.b16 %v646
          %v734 = vunpack.c.l.b16 %v647
          %v735 = vunpack.c.l.b16 %v648
          %v736 = vunpack.c.l.b16 %v649
          %v737 = vunpack.c.l.b16 %v650
          %v738 = vunpack.c.l.b16 %v651
          %v739 = vunpack.c.l.b16 %v652
          %v740 = vunpack.c.l.b16 %v653
          %v741 = vpack.c.b16 %v726, %v725
          %v742 = vpack.c.b16 %v728, %v727
          %v743 = vpack.c.b16 %v730, %v729
          %v744 = vpack.c.b16 %v732, %v731
          %v745 = vpack.c.b16 %v734, %v733
          %v746 = vpack.c.b16 %v736, %v735
          %v747 = vpack.c.b16 %v738, %v737
          %v748 = vpack.c.b16 %v740, %v739
          %757 = vmatprep.subr.bf16.mxu0 0
          %758 = vmatpush1.bf16.msra.mxu0 %v741
          %759 = vmatprep.subr.bf16.mxu0 0
          %760 = vmatpush1.bf16.msra.mxu0 %v742
          %761 = vmatprep.subr.bf16.mxu0 0
          %762 = vmatpush1.bf16.msra.mxu0 %v743
          %763 = vmatprep.subr.bf16.mxu0 0
          %764 = vmatpush1.bf16.msra.mxu0 %v744
          %765 = vmatprep.subr.bf16.mxu0 0
          %766 = vmatpush1.bf16.msra.mxu0 %v745
          %767 = vmatprep.subr.bf16.mxu0 0
          %768 = vmatpush1.bf16.msra.mxu0 %v746
          %769 = vmatprep.subr.bf16.mxu0 0
          %770 = vmatpush1.bf16.msra.mxu0 %v747
          %771 = vmatprep.subr.bf16.mxu0 0
          %772 = vmatpush1.bf16.msra.mxu0 %v748
          %773 = vmatprep.subr.bf16.mxu0 0
          %774 = vmatpush1.bf16.msra.mxu0 0
          %775 = vmatprep.subr.bf16.mxu0 0
          %776 = vmatpush1.bf16.msra.mxu0 0
          %777 = vmatprep.subr.bf16.mxu0 0
          %778 = vmatpush1.bf16.msra.mxu0 0
          %779 = vmatprep.subr.bf16.mxu0 0
          %780 = vmatpush1.bf16.msra.mxu0 0
          %781 = vmatprep.subr.bf16.mxu0 0
          %782 = vmatpush1.bf16.msra.mxu0 0
          %783 = vmatprep.subr.bf16.mxu0 0
          %784 = vmatpush1.bf16.msra.mxu0 0
          %785 = vmatprep.subr.bf16.mxu0 0
          %786 = vmatpush1.bf16.msra.mxu0 0
          %787 = vmatprep.subr.bf16.mxu0 0
          %788 = vmatpush1.bf16.msra.mxu0 0
          %789 = vmatprep.mubr.bf16.mxu0 0
          %790 = vmatmul.mubr.bf16.gmra.mrb[0].mxu0 %v693
          %v791 = vpop.f32.mrb[0].mxu0
          %v792 = vadd.f32 %v659, %v791
          %v793 = vpop.f32.mrb[0].mxu0
          %v794 = vpop.f32.mrb[0].mxu0
          %v795 = vadd.f32 %v659, %v794
          %v796 = vpop.f32.mrb[0].mxu0
          %797 = vmatprep.mubr.bf16.mxu0 0
          %798 = vmatmul.mubr.bf16.gmra.mrb[0].mxu0 %v694
          %v799 = vpop.f32.mrb[0].mxu0
          %v800 = vadd.f32 %v659, %v799
          %v801 = vpop.f32.mrb[0].mxu0
          %v802 = vpop.f32.mrb[0].mxu0
          %v803 = vadd.f32 %v659, %v802
          %v804 = vpop.f32.mrb[0].mxu0
          %805 = vmatprep.mubr.bf16.mxu0 0
          %806 = vmatmul.mubr.bf16.gmra.mrb[0].mxu0 %v695
          %v807 = vpop.f32.mrb[0].mxu0
          %v808 = vadd.f32 %v659, %v807
          %v809 = vpop.f32.mrb[0].mxu0
          %v810 = vpop.f32.mrb[0].mxu0
          %v811 = vadd.f32 %v659, %v810
          %v812 = vpop.f32.mrb[0].mxu0
          %813 = vmatprep.mubr.bf16.mxu0 0
          %814 = vmatmul.mubr.bf16.gmra.mrb[0].mxu0 %v696
          %v815 = vpop.f32.mrb[0].mxu0
          %v816 = vadd.f32 %v659, %v815
          %v817 = vpop.f32.mrb[0].mxu0
          %v818 = vpop.f32.mrb[0].mxu0
          %v819 = vadd.f32 %v659, %v818
          %v820 = vpop.f32.mrb[0].mxu0
          %821 = vmatprep.mubr.bf16.mxu0 0
          %822 = vmatmul.mubr.bf16.gmra.mrb[0].mxu0 %v697
          %v823 = vpop.f32.mrb[0].mxu0
          %v824 = vadd.f32 %v659, %v823
          %v825 = vpop.f32.mrb[0].mxu0
          %v826 = vpop.f32.mrb[0].mxu0
          %v827 = vadd.f32 %v659, %v826
          %v828 = vpop.f32.mrb[0].mxu0
          %829 = vmatprep.mubr.bf16.mxu0 0
          %830 = vmatmul.mubr.bf16.gmra.mrb[0].mxu0 %v698
          %v831 = vpop.f32.mrb[0].mxu0
          %v832 = vadd.f32 %v659, %v831
          %v833 = vpop.f32.mrb[0].mxu0
          %v834 = vpop.f32.mrb[0].mxu0
          %v835 = vadd.f32 %v659, %v834
          %v836 = vpop.f32.mrb[0].mxu0
          %837 = vmatprep.mubr.bf16.mxu0 0
          %838 = vmatmul.mubr.bf16.gmra.mrb[0].mxu0 %v699
          %v839 = vpop.f32.mrb[0].mxu0
          %v840 = vadd.f32 %v659, %v839
          %v841 = vpop.f32.mrb[0].mxu0
          %v842 = vpop.f32.mrb[0].mxu0
          %v843 = vadd.f32 %v659, %v842
          %v844 = vpop.f32.mrb[0].mxu0
          %845 = vmatprep.mubr.bf16.mxu0 0
          %846 = vmatmul.mubr.bf16.gmra.mrb[0].mxu0 %v700
          %v847 = vpop.f32.mrb[0].mxu0
          %v848 = vadd.f32 %v659, %v847
          %v849 = vpop.f32.mrb[0].mxu0
          %v850 = vpop.f32.mrb[0].mxu0
          %v851 = vadd.f32 %v659, %v850
          %v852 = vpop.f32.mrb[0].mxu0
          %853 = vdwg.mxu0
          %v854 = vld [vmem:[#allocation13] sm:$0xf]
          %v855 = vld [vmem:[#allocation13 + $0x4] sm:$0xf]
          %v856 = vld [vmem:[#allocation13 + $0x8] sm:$0xf]
          %v857 = vld [vmem:[#allocation13 + $0xc] sm:$0xf]
          %v858 = vld [vmem:[#allocation13 + $0x10] sm:$0xf]
          %v859 = vld [vmem:[#allocation13 + $0x14] sm:$0xf]
          %v860 = vld [vmem:[#allocation13 + $0x18] sm:$0xf]
          %v861 = vld [vmem:[#allocation13 + $0x1c] sm:$0xf]
          %v862 = vld [vmem:[#allocation13 + $0x20] sm:$0xf]
          %v863 = vld [vmem:[#allocation13 + $0x24] sm:$0xf]
          %v864 = vld [vmem:[#allocation13 + $0x28] sm:$0xf]
          %v865 = vld [vmem:[#allocation13 + $0x2c] sm:$0xf]
          %v866 = vld [vmem:[#allocation13 + $0x30] sm:$0xf]
          %v867 = vld [vmem:[#allocation13 + $0x34] sm:$0xf]
          %v868 = vld [vmem:[#allocation13 + $0x38] sm:$0xf]
          %v869 = vld [vmem:[#allocation13 + $0x3c] sm:$0xf]
          %v870 = vld [vmem:[%s8] sm:$0x1]
          %v872 = vlaneseq
          %v873 = vshrl.u32 %v872, 7
          %v874 = vsub.s32 0, %v873
          %v875 = vrot.slane %v870, %v874
          %v893 = vunpack.c.l.b16 %v622
          %v894 = vunpack.c.l.b16 %v623
          %v895 = vunpack.c.l.b16 %v624
          %v896 = vunpack.c.l.b16 %v625
          %v897 = vunpack.c.l.b16 %v626
          %v898 = vunpack.c.l.b16 %v627
          %v899 = vunpack.c.l.b16 %v628
          %v900 = vunpack.c.l.b16 %v629
          %v901 = vunpack.c.l.b16 %v630
          %v902 = vunpack.c.l.b16 %v631
          %v903 = vunpack.c.l.b16 %v632
          %v904 = vunpack.c.l.b16 %v633
          %v905 = vunpack.c.l.b16 %v634
          %v906 = vunpack.c.l.b16 %v635
          %v907 = vunpack.c.l.b16 %v636
          %v908 = vunpack.c.l.b16 %v637
          %v909 = vpack.c.b16 %v894, %v893
          %v910 = vpack.c.b16 %v896, %v895
          %v911 = vpack.c.b16 %v898, %v897
          %v912 = vpack.c.b16 %v900, %v899
          %v913 = vpack.c.b16 %v902, %v901
          %v914 = vpack.c.b16 %v904, %v903
          %v915 = vpack.c.b16 %v906, %v905
          %v916 = vpack.c.b16 %v908, %v907
          %v941 = vunpack.c.l.b16 %v854
          %v942 = vunpack.c.l.b16 %v855
          %v943 = vunpack.c.l.b16 %v856
          %v944 = vunpack.c.l.b16 %v857
          %v945 = vunpack.c.l.b16 %v858
          %v946 = vunpack.c.l.b16 %v859
          %v947 = vunpack.c.l.b16 %v860
          %v948 = vunpack.c.l.b16 %v861
          %v949 = vunpack.c.l.b16 %v862
          %v950 = vunpack.c.l.b16 %v863
          %v951 = vunpack.c.l.b16 %v864
          %v952 = vunpack.c.l.b16 %v865
          %v953 = vunpack.c.l.b16 %v866
          %v954 = vunpack.c.l.b16 %v867
          %v955 = vunpack.c.l.b16 %v868
          %v956 = vunpack.c.l.b16 %v869
          %v957 = vpack.c.b16 %v942, %v941
          %v958 = vpack.c.b16 %v944, %v943
          %v959 = vpack.c.b16 %v946, %v945
          %v960 = vpack.c.b16 %v948, %v947
          %v961 = vpack.c.b16 %v950, %v949
          %v962 = vpack.c.b16 %v952, %v951
          %v963 = vpack.c.b16 %v954, %v953
          %v964 = vpack.c.b16 %v956, %v955
          %973 = vmatprep.subr.bf16.mxu0 0
          %974 = vmatpush1.bf16.msra.mxu0 %v957
          %975 = vmatprep.subr.bf16.mxu0 0
          %976 = vmatpush1.bf16.msra.mxu0 %v958
          %977 = vmatprep.subr.bf16.mxu0 0
          %978 = vmatpush1.bf16.msra.mxu0 %v959
          %979 = vmatprep.subr.bf16.mxu0 0
          %980 = vmatpush1.bf16.msra.mxu0 %v960
          %981 = vmatprep.subr.bf16.mxu0 0
          %982 = vmatpush1.bf16.msra.mxu0 %v961
          %983 = vmatprep.subr.bf16.mxu0 0
          %984 = vmatpush1.bf16.msra.mxu0 %v962
          %985 = vmatprep.subr.bf16.mxu0 0
          %986 = vmatpush1.bf16.msra.mxu0 %v963
          %987 = vmatprep.subr.bf16.mxu0 0
          %988 = vmatpush1.bf16.msra.mxu0 %v964
          %989 = vmatprep.subr.bf16.mxu0 0
          %990 = vmatpush1.bf16.msra.mxu0 0
          %991 = vmatprep.subr.bf16.mxu0 0
          %992 = vmatpush1.bf16.msra.mxu0 0
          %993 = vmatprep.subr.bf16.mxu0 0
          %994 = vmatpush1.bf16.msra.mxu0 0
          %995 = vmatprep.subr.bf16.mxu0 0
          %996 = vmatpush1.bf16.msra.mxu0 0
          %997 = vmatprep.subr.bf16.mxu0 0
          %998 = vmatpush1.bf16.msra.mxu0 0
          %999 = vmatprep.subr.bf16.mxu0 0
          %1000 = vmatpush1.bf16.msra.mxu0 0
          %1001 = vmatprep.subr.bf16.mxu0 0
          %1002 = vmatpush1.bf16.msra.mxu0 0
          %1003 = vmatprep.subr.bf16.mxu0 0
          %1004 = vmatpush1.bf16.msra.mxu0 0
          %1005 = vmatprep.mubr.bf16.mxu0 0
          %1006 = vmatmul.mubr.bf16.gmra.mrb[0].mxu0 %v909
          %v1007 = vpop.f32.mrb[0].mxu0
          %v1008 = vadd.f32 %v875, %v1007
          %v1009 = vpop.f32.mrb[0].mxu0
          %v1010 = vpop.f32.mrb[0].mxu0
          %v1011 = vadd.f32 %v875, %v1010
          %v1012 = vpop.f32.mrb[0].mxu0
          %1013 = vmatprep.mubr.bf16.mxu0 0
          %1014 = vmatmul.mubr.bf16.gmra.mrb[0].mxu0 %v910
          %v1015 = vpop.f32.mrb[0].mxu0
          %v1016 = vadd.f32 %v875, %v1015
          %v1017 = vpop.f32.mrb[0].mxu0
          %v1018 = vpop.f32.mrb[0].mxu0
          %v1019 = vadd.f32 %v875, %v1018
          %v1020 = vpop.f32.mrb[0].mxu0
          %1021 = vmatprep.mubr.bf16.mxu0 0
          %1022 = vmatmul.mubr.bf16.gmra.mrb[0].mxu0 %v911
          %v1023 = vpop.f32.mrb[0].mxu0
          %v1024 = vadd.f32 %v875, %v1023
          %v1025 = vpop.f32.mrb[0].mxu0
          %v1026 = vpop.f32.mrb[0].mxu0
          %v1027 = vadd.f32 %v875, %v1026
          %v1028 = vpop.f32.mrb[0].mxu0
          %1029 = vmatprep.mubr.bf16.mxu0 0
          %1030 = vmatmul.mubr.bf16.gmra.mrb[0].mxu0 %v912
          %v1031 = vpop.f32.mrb[0].mxu0
          %v1032 = vadd.f32 %v875, %v1031
          %v1033 = vpop.f32.mrb[0].mxu0
          %v1034 = vpop.f32.mrb[0].mxu0
          %v1035 = vadd.f32 %v875, %v1034
          %v1036 = vpop.f32.mrb[0].mxu0
          %1037 = vmatprep.mubr.bf16.mxu0 0
          %1038 = vmatmul.mubr.bf16.gmra.mrb[0].mxu0 %v913
          %v1039 = vpop.f32.mrb[0].mxu0
          %v1040 = vadd.f32 %v875, %v1039
          %v1041 = vpop.f32.mrb[0].mxu0
          %v1042 = vpop.f32.mrb[0].mxu0
          %v1043 = vadd.f32 %v875, %v1042
          %v1044 = vpop.f32.mrb[0].mxu0
          %1045 = vmatprep.mubr.bf16.mxu0 0
          %1046 = vmatmul.mubr.bf16.gmra.mrb[0].mxu0 %v914
          %v1047 = vpop.f32.mrb[0].mxu0
          %v1048 = vadd.f32 %v875, %v1047
          %v1049 = vpop.f32.mrb[0].mxu0
          %v1050 = vpop.f32.mrb[0].mxu0
          %v1051 = vadd.f32 %v875, %v1050
          %v1052 = vpop.f32.mrb[0].mxu0
          %1053 = vmatprep.mubr.bf16.mxu0 0
          %1054 = vmatmul.mubr.bf16.gmra.mrb[0].mxu0 %v915
          %v1055 = vpop.f32.mrb[0].mxu0
          %v1056 = vadd.f32 %v875, %v1055
          %v1057 = vpop.f32.mrb[0].mxu0
          %v1058 = vpop.f32.mrb[0].mxu0
          %v1059 = vadd.f32 %v875, %v1058
          %v1060 = vpop.f32.mrb[0].mxu0
          %1061 = vmatprep.mubr.bf16.mxu0 0
          %1062 = vmatmul.mubr.bf16.gmra.mrb[0].mxu0 %v916
          %v1063 = vpop.f32.mrb[0].mxu0
          %v1064 = vadd.f32 %v875, %v1063
          %v1065 = vpop.f32.mrb[0].mxu0
          %v1066 = vpop.f32.mrb[0].mxu0
          %v1067 = vadd.f32 %v875, %v1066
          %v1068 = vpop.f32.mrb[0].mxu0
          %1069 = vdwg.mxu0
          %v1070 = vpack.c.bf16 %v795, %v792
          %v1071 = vpack.c.bf16 %v803, %v800
          %v1072 = vpack.c.bf16 %v811, %v808
          %v1073 = vpack.c.bf16 %v819, %v816
          %v1074 = vpack.c.bf16 %v827, %v824
          %v1075 = vpack.c.bf16 %v835, %v832
          %v1076 = vpack.c.bf16 %v843, %v840
          %v1077 = vpack.c.bf16 %v851, %v848
          %1078 = vst [vmem:[#allocation2] sm:$0xff] %v1070
          %1079 = vst [vmem:[#allocation2 + $0x8] sm:$0xff] %v1071
          %1080 = vst [vmem:[#allocation2 + $0x10] sm:$0xff] %v1072
          %1081 = vst [vmem:[#allocation2 + $0x18] sm:$0xff] %v1073
          %1082 = vst [vmem:[#allocation2 + $0x20] sm:$0xff] %v1074
          %1083 = vst [vmem:[#allocation2 + $0x28] sm:$0xff] %v1075
          %1084 = vst [vmem:[#allocation2 + $0x30] sm:$0xff] %v1076
          %1085 = vst [vmem:[#allocation2 + $0x38] sm:$0xff] %v1077
          %v1086 = vpack.c.bf16 %v1011, %v1008
          %v1087 = vpack.c.bf16 %v1019, %v1016
          %v1088 = vpack.c.bf16 %v1027, %v1024
          %v1089 = vpack.c.bf16 %v1035, %v1032
          %v1090 = vpack.c.bf16 %v1043, %v1040
          %v1091 = vpack.c.bf16 %v1051, %v1048
          %v1092 = vpack.c.bf16 %v1059, %v1056
          %v1093 = vpack.c.bf16 %v1067, %v1064
          %1094 = vst [vmem:[#allocation3] sm:$0xff] %v1086
          %1095 = vst [vmem:[#allocation3 + $0x8] sm:$0xff] %v1087
          %1096 = vst [vmem:[#allocation3 + $0x10] sm:$0xff] %v1088
          %1097 = vst [vmem:[#allocation3 + $0x18] sm:$0xff] %v1089
          %1098 = vst [vmem:[#allocation3 + $0x20] sm:$0xff] %v1090
          %1099 = vst [vmem:[#allocation3 + $0x28] sm:$0xff] %v1091
          %1100 = vst [vmem:[#allocation3 + $0x30] sm:$0xff] %v1092
          %1101 = vst [vmem:[#allocation3 + $0x38] sm:$0xff] %v1093
        $region96: #{tpu_custom_call.1} parent=63 // pred_fallthru
          _
        %v1102 = vld [vmem:[%s508] sm:$0xf]
        %v1103 = vld [vmem:[%s508 + $0x4] sm:$0xf]
        %v1104 = vld [vmem:[%s508 + $0x8] sm:$0xf]
        %v1105 = vld [vmem:[%s508 + $0xc] sm:$0xf]
        %v1106 = vld [vmem:[%s508 + $0x10] sm:$0xf]
        %v1107 = vld [vmem:[%s508 + $0x14] sm:$0xf]
        %v1108 = vld [vmem:[%s508 + $0x18] sm:$0xf]
        %v1109 = vld [vmem:[%s508 + $0x1c] sm:$0xf]
        %v1110 = vld [vmem:[%s508 + $0x20] sm:$0xf]
        %v1111 = vld [vmem:[%s508 + $0x24] sm:$0xf]
        %v1112 = vld [vmem:[%s508 + $0x28] sm:$0xf]
        %v1113 = vld [vmem:[%s508 + $0x2c] sm:$0xf]
        %v1114 = vld [vmem:[%s508 + $0x30] sm:$0xf]
        %v1115 = vld [vmem:[%s508 + $0x34] sm:$0xf]
        %v1116 = vld [vmem:[%s508 + $0x38] sm:$0xf]
        %v1117 = vld [vmem:[%s508 + $0x3c] sm:$0xf]
        %v1118 = vld [vmem:[#allocation10] sm:$0xf]
        %v1119 = vld [vmem:[#allocation10 + $0x4] sm:$0xf]
        %v1120 = vld [vmem:[#allocation10 + $0x8] sm:$0xf]
        %v1121 = vld [vmem:[#allocation10 + $0xc] sm:$0xf]
        %v1122 = vld [vmem:[#allocation10 + $0x10] sm:$0xf]
        %v1123 = vld [vmem:[#allocation10 + $0x14] sm:$0xf]
        %v1124 = vld [vmem:[#allocation10 + $0x18] sm:$0xf]
        %v1125 = vld [vmem:[#allocation10 + $0x1c] sm:$0xf]
        %v1126 = vld [vmem:[#allocation10 + $0x20] sm:$0xf]
        %v1127 = vld [vmem:[#allocation10 + $0x24] sm:$0xf]
        %v1128 = vld [vmem:[#allocation10 + $0x28] sm:$0xf]
        %v1129 = vld [vmem:[#allocation10 + $0x2c] sm:$0xf]
        %v1130 = vld [vmem:[#allocation10 + $0x30] sm:$0xf]
        %v1131 = vld [vmem:[#allocation10 + $0x34] sm:$0xf]
        %v1132 = vld [vmem:[#allocation10 + $0x38] sm:$0xf]
        %v1133 = vld [vmem:[#allocation10 + $0x3c] sm:$0xf]
        %v1134 = vld [vmem:[%s4] sm:$0x1]
        %v1136 = vlaneseq
        %v1137 = vshrl.u32 %v1136, 7
        %v1138 = vsub.s32 0, %v1137
        %v1139 = vrot.slane %v1134, %v1138
        %v1157 = vunpack.c.l.b16 %v1102
        %v1158 = vunpack.c.l.b16 %v1103
        %v1159 = vunpack.c.l.b16 %v1104
        %v1160 = vunpack.c.l.b16 %v1105
        %v1161 = vunpack.c.l.b16 %v1106
        %v1162 = vunpack.c.l.b16 %v1107
        %v1163 = vunpack.c.l.b16 %v1108
        %v1164 = vunpack.c.l.b16 %v1109
        %v1165 = vunpack.c.l.b16 %v1110
        %v1166 = vunpack.c.l.b16 %v1111
        %v1167 = vunpack.c.l.b16 %v1112
        %v1168 = vunpack.c.l.b16 %v1113
        %v1169 = vunpack.c.l.b16 %v1114
        %v1170 = vunpack.c.l.b16 %v1115
        %v1171 = vunpack.c.l.b16 %v1116
        %v1172 = vunpack.c.l.b16 %v1117
        %v1173 = vpack.c.b16 %v1158, %v1157
        %v1174 = vpack.c.b16 %v1160, %v1159
        %v1175 = vpack.c.b16 %v1162, %v1161
        %v1176 = vpack.c.b16 %v1164, %v1163
        %v1177 = vpack.c.b16 %v1166, %v1165
        %v1178 = vpack.c.b16 %v1168, %v1167
        %v1179 = vpack.c.b16 %v1170, %v1169
        %v1180 = vpack.c.b16 %v1172, %v1171
        %v1205 = vunpack.c.l.b16 %v1118
        %v1206 = vunpack.c.l.b16 %v1119
        %v1207 = vunpack.c.l.b16 %v1120
        %v1208 = vunpack.c.l.b16 %v1121
        %v1209 = vunpack.c.l.b16 %v1122
        %v1210 = vunpack.c.l.b16 %v1123
        %v1211 = vunpack.c.l.b16 %v1124
        %v1212 = vunpack.c.l.b16 %v1125
        %v1213 = vunpack.c.l.b16 %v1126
        %v1214 = vunpack.c.l.b16 %v1127
        %v1215 = vunpack.c.l.b16 %v1128
        %v1216 = vunpack.c.l.b16 %v1129
        %v1217 = vunpack.c.l.b16 %v1130
        %v1218 = vunpack.c.l.b16 %v1131
        %v1219 = vunpack.c.l.b16 %v1132
        %v1220 = vunpack.c.l.b16 %v1133
        %v1221 = vpack.c.b16 %v1206, %v1205
        %v1222 = vpack.c.b16 %v1208, %v1207
        %v1223 = vpack.c.b16 %v1210, %v1209
        %v1224 = vpack.c.b16 %v1212, %v1211
        %v1225 = vpack.c.b16 %v1214, %v1213
        %v1226 = vpack.c.b16 %v1216, %v1215
        %v1227 = vpack.c.b16 %v1218, %v1217
        %v1228 = vpack.c.b16 %v1220, %v1219
        %1237 = vmatprep.subr.bf16.mxu0 0
        %1238 = vmatpush1.bf16.msra.mxu0 %v1221
        %1239 = vmatprep.subr.bf16.mxu0 0
        %1240 = vmatpush1.bf16.msra.mxu0 %v1222
        %1241 = vmatprep.subr.bf16.mxu0 0
        %1242 = vmatpush1.bf16.msra.mxu0 %v1223
        %1243 = vmatprep.subr.bf16.mxu0 0
        %1244 = vmatpush1.bf16.msra.mxu0 %v1224
        %1245 = vmatprep.subr.bf16.mxu0 0
        %1246 = vmatpush1.bf16.msra.mxu0 %v1225
        %1247 = vmatprep.subr.bf16.mxu0 0
        %1248 = vmatpush1.bf16.msra.mxu0 %v1226
        %1249 = vmatprep.subr.bf16.mxu0 0
        %1250 = vmatpush1.bf16.msra.mxu0 %v1227
        %1251 = vmatprep.subr.bf16.mxu0 0
        %1252 = vmatpush1.bf16.msra.mxu0 %v1228
        %1253 = vmatprep.subr.bf16.mxu0 0
        %1254 = vmatpush1.bf16.msra.mxu0 0
        %1255 = vmatprep.subr.bf16.mxu0 0
        %1256 = vmatpush1.bf16.msra.mxu0 0
        %1257 = vmatprep.subr.bf16.mxu0 0
        %1258 = vmatpush1.bf16.msra.mxu0 0
        %1259 = vmatprep.subr.bf16.mxu0 0
        %1260 = vmatpush1.bf16.msra.mxu0 0
        %1261 = vmatprep.subr.bf16.mxu0 0
        %1262 = vmatpush1.bf16.msra.mxu0 0
        %1263 = vmatprep.subr.bf16.mxu0 0
        %1264 = vmatpush1.bf16.msra.mxu0 0
        %1265 = vmatprep.subr.bf16.mxu0 0
        %1266 = vmatpush1.bf16.msra.mxu0 0
        %1267 = vmatprep.subr.bf16.mxu0 0
        %1268 = vmatpush1.bf16.msra.mxu0 0
        %1269 = vmatprep.mubr.bf16.mxu0 0
        %1270 = vmatmul.mubr.bf16.gmra.mrb[0].mxu0 %v1173
        %v1271 = vpop.f32.mrb[0].mxu0
        %v1272 = vadd.f32 %v1139, %v1271
        %v1273 = vpop.f32.mrb[0].mxu0
        %v1274 = vpop.f32.mrb[0].mxu0
        %v1275 = vadd.f32 %v1139, %v1274
        %v1276 = vpop.f32.mrb[0].mxu0
        %1277 = vmatprep.mubr.bf16.mxu0 0
        %1278 = vmatmul.mubr.bf16.gmra.mrb[0].mxu0 %v1174
        %v1279 = vpop.f32.mrb[0].mxu0
        %v1280 = vadd.f32 %v1139, %v1279
        %v1281 = vpop.f32.mrb[0].mxu0
        %v1282 = vpop.f32.mrb[0].mxu0
        %v1283 = vadd.f32 %v1139, %v1282
        %v1284 = vpop.f32.mrb[0].mxu0
        %1285 = vmatprep.mubr.bf16.mxu0 0
        %1286 = vmatmul.mubr.bf16.gmra.mrb[0].mxu0 %v1175
        %v1287 = vpop.f32.mrb[0].mxu0
        %v1288 = vadd.f32 %v1139, %v1287
        %v1289 = vpop.f32.mrb[0].mxu0
        %v1290 = vpop.f32.mrb[0].mxu0
        %v1291 = vadd.f32 %v1139, %v1290
        %v1292 = vpop.f32.mrb[0].mxu0
        %1293 = vmatprep.mubr.bf16.mxu0 0
        %1294 = vmatmul.mubr.bf16.gmra.mrb[0].mxu0 %v1176
        %v1295 = vpop.f32.mrb[0].mxu0
        %v1296 = vadd.f32 %v1139, %v1295
        %v1297 = vpop.f32.mrb[0].mxu0
        %v1298 = vpop.f32.mrb[0].mxu0
        %v1299 = vadd.f32 %v1139, %v1298
        %v1300 = vpop.f32.mrb[0].mxu0
        %1301 = vmatprep.mubr.bf16.mxu0 0
        %1302 = vmatmul.mubr.bf16.gmra.mrb[0].mxu0 %v1177
        %v1303 = vpop.f32.mrb[0].mxu0
        %v1304 = vadd.f32 %v1139, %v1303
        %v1305 = vpop.f32.mrb[0].mxu0
        %v1306 = vpop.f32.mrb[0].mxu0
        %v1307 = vadd.f32 %v1139, %v1306
        %v1308 = vpop.f32.mrb[0].mxu0
        %1309 = vmatprep.mubr.bf16.mxu0 0
        %1310 = vmatmul.mubr.bf16.gmra.mrb[0].mxu0 %v1178
        %v1311 = vpop.f32.mrb[0].mxu0
        %v1312 = vadd.f32 %v1139, %v1311
        %v1313 = vpop.f32.mrb[0].mxu0
        %v1314 = vpop.f32.mrb[0].mxu0
        %v1315 = vadd.f32 %v1139, %v1314
        %v1316 = vpop.f32.mrb[0].mxu0
        %1317 = vmatprep.mubr.bf16.mxu0 0
        %1318 = vmatmul.mubr.bf16.gmra.mrb[0].mxu0 %v1179
        %v1319 = vpop.f32.mrb[0].mxu0
        %v1320 = vadd.f32 %v1139, %v1319
        %v1321 = vpop.f32.mrb[0].mxu0
        %v1322 = vpop.f32.mrb[0].mxu0
        %v1323 = vadd.f32 %v1139, %v1322
        %v1324 = vpop.f32.mrb[0].mxu0
        %1325 = vmatprep.mubr.bf16.mxu0 0
        %1326 = vmatmul.mubr.bf16.gmra.mrb[0].mxu0 %v1180
        %v1327 = vpop.f32.mrb[0].mxu0
        %v1328 = vadd.f32 %v1139, %v1327
        %v1329 = vpop.f32.mrb[0].mxu0
        %v1330 = vpop.f32.mrb[0].mxu0
        %v1331 = vadd.f32 %v1139, %v1330
        %v1332 = vpop.f32.mrb[0].mxu0
        %1333 = vdwg.mxu0
        %v1334 = vpack.c.bf16 %v1275, %v1272
        %v1335 = vpack.c.bf16 %v1283, %v1280
        %v1336 = vpack.c.bf16 %v1291, %v1288
        %v1337 = vpack.c.bf16 %v1299, %v1296
        %v1338 = vpack.c.bf16 %v1307, %v1304
        %v1339 = vpack.c.bf16 %v1315, %v1312
        %v1340 = vpack.c.bf16 %v1323, %v1320
        %v1341 = vpack.c.bf16 %v1331, %v1328
        %v1342 = vld [vmem:[#allocation2] sm:$0xff]
        %v1343 = vld [vmem:[#allocation2 + $0x8] sm:$0xff]
        %v1344 = vld [vmem:[#allocation2 + $0x10] sm:$0xff]
        %v1345 = vld [vmem:[#allocation2 + $0x18] sm:$0xff]
        %v1346 = vld [vmem:[#allocation2 + $0x20] sm:$0xff]
        %v1347 = vld [vmem:[#allocation2 + $0x28] sm:$0xff]
        %v1348 = vld [vmem:[#allocation2 + $0x30] sm:$0xff]
        %v1349 = vld [vmem:[#allocation2 + $0x38] sm:$0xff]
        %1350 = vmatprep.subr.bf16.mxu0 0
        %1351 = vmatpush1.bf16.xpose.msra.mxu0 %v1342
        %1352 = vmatprep.subr.bf16.mxu0 0
        %1353 = vmatpush1.bf16.xpose.msra.mxu0 %v1343
        %1354 = vmatprep.subr.bf16.mxu0 0
        %1355 = vmatpush1.bf16.xpose.msra.mxu0 %v1344
        %1356 = vmatprep.subr.bf16.mxu0 0
        %1357 = vmatpush1.bf16.xpose.msra.mxu0 %v1345
        %1358 = vmatprep.subr.bf16.mxu0 0
        %1359 = vmatpush1.bf16.xpose.msra.mxu0 %v1346
        %1360 = vmatprep.subr.bf16.mxu0 0
        %1361 = vmatpush1.bf16.xpose.msra.mxu0 %v1347
        %1362 = vmatprep.subr.bf16.mxu0 0
        %1363 = vmatpush1.bf16.xpose.msra.mxu0 %v1348
        %1364 = vmatprep.subr.bf16.mxu0 0
        %1365 = vmatpush1.bf16.xpose.msra.mxu0 %v1349
        %1366 = vmatprep.subr.bf16.mxu0 0
        %1367 = vmatpush1.bf16.xpose.msra.mxu0 0
        %1368 = vmatprep.subr.bf16.mxu0 0
        %1369 = vmatpush1.bf16.xpose.msra.mxu0 0
        %1370 = vmatprep.subr.bf16.mxu0 0
        %1371 = vmatpush1.bf16.xpose.msra.mxu0 0
        %1372 = vmatprep.subr.bf16.mxu0 0
        %1373 = vmatpush1.bf16.xpose.msra.mxu0 0
        %1374 = vmatprep.subr.bf16.mxu0 0
        %1375 = vmatpush1.bf16.xpose.msra.mxu0 0
        %1376 = vmatprep.subr.bf16.mxu0 0
        %1377 = vmatpush1.bf16.xpose.msra.mxu0 0
        %1378 = vmatprep.subr.bf16.mxu0 0
        %1379 = vmatpush1.bf16.xpose.msra.mxu0 0
        %1380 = vmatprep.subr.bf16.mxu0 0
        %1381 = vmatpush1.bf16.xpose.msra.mxu0 0
        %1382 = vmatprep.mubr.bf16.mxu0 0
        %1383 = vmatmul.mubr.bf16.gmra.mrb[0].mxu0 %v1334
        %v1384 = vpop.f32.mrb[0].mxu0
        %v1385 = vadd.f32 0.0, %v1384
        %v1386 = vpop.f32.mrb[0].mxu0
        %v1387 = vpop.f32.mrb[0].mxu0
        %v1388 = vadd.f32 0.0, %v1387
        %v1389 = vpop.f32.mrb[0].mxu0
        %1390 = vmatprep.mubr.bf16.mxu0 0
        %1391 = vmatmul.mubr.bf16.gmra.mrb[0].mxu0 %v1335
        %v1392 = vpop.f32.mrb[0].mxu0
        %v1393 = vadd.f32 0.0, %v1392
        %v1394 = vpop.f32.mrb[0].mxu0
        %v1395 = vpop.f32.mrb[0].mxu0
        %v1396 = vadd.f32 0.0, %v1395
        %v1397 = vpop.f32.mrb[0].mxu0
        %1398 = vmatprep.mubr.bf16.mxu0 0
        %1399 = vmatmul.mubr.bf16.gmra.mrb[0].mxu0 %v1336
        %v1400 = vpop.f32.mrb[0].mxu0
        %v1401 = vadd.f32 0.0, %v1400
        %v1402 = vpop.f32.mrb[0].mxu0
        %v1403 = vpop.f32.mrb[0].mxu0
        %v1404 = vadd.f32 0.0, %v1403
        %v1405 = vpop.f32.mrb[0].mxu0
        %1406 = vmatprep.mubr.bf16.mxu0 0
        %1407 = vmatmul.mubr.bf16.gmra.mrb[0].mxu0 %v1337
        %v1408 = vpop.f32.mrb[0].mxu0
        %v1409 = vadd.f32 0.0, %v1408
        %v1410 = vpop.f32.mrb[0].mxu0
        %v1411 = vpop.f32.mrb[0].mxu0
        %v1412 = vadd.f32 0.0, %v1411
        %v1413 = vpop.f32.mrb[0].mxu0
        %1414 = vmatprep.mubr.bf16.mxu0 0
        %1415 = vmatmul.mubr.bf16.gmra.mrb[0].mxu0 %v1338
        %v1416 = vpop.f32.mrb[0].mxu0
        %v1417 = vadd.f32 0.0, %v1416
        %v1418 = vpop.f32.mrb[0].mxu0
        %v1419 = vpop.f32.mrb[0].mxu0
        %v1420 = vadd.f32 0.0, %v1419
        %v1421 = vpop.f32.mrb[0].mxu0
        %1422 = vmatprep.mubr.bf16.mxu0 0
        %1423 = vmatmul.mubr.bf16.gmra.mrb[0].mxu0 %v1339
        %v1424 = vpop.f32.mrb[0].mxu0
        %v1425 = vadd.f32 0.0, %v1424
        %v1426 = vpop.f32.mrb[0].mxu0
        %v1427 = vpop.f32.mrb[0].mxu0
        %v1428 = vadd.f32 0.0, %v1427
        %v1429 = vpop.f32.mrb[0].mxu0
        %1430 = vmatprep.mubr.bf16.mxu0 0
        %1431 = vmatmul.mubr.bf16.gmra.mrb[0].mxu0 %v1340
        %v1432 = vpop.f32.mrb[0].mxu0
        %v1433 = vadd.f32 0.0, %v1432
        %v1434 = vpop.f32.mrb[0].mxu0
        %v1435 = vpop.f32.mrb[0].mxu0
        %v1436 = vadd.f32 0.0, %v1435
        %v1437 = vpop.f32.mrb[0].mxu0
        %1438 = vmatprep.mubr.bf16.mxu0 0
        %1439 = vmatmul.mubr.bf16.gmra.mrb[0].mxu0 %v1341
        %v1440 = vpop.f32.mrb[0].mxu0
        %v1441 = vadd.f32 0.0, %v1440
        %v1442 = vpop.f32.mrb[0].mxu0
        %v1443 = vpop.f32.mrb[0].mxu0
        %v1444 = vadd.f32 0.0, %v1443
        %v1445 = vpop.f32.mrb[0].mxu0
        %1446 = vdwg.mxu0
        %1447 = vmax.xlane.f32.xlu0 %v1385
        %v1448 = vpop.xlane.xlu0 %1447
        %1449 = vmax.xlane.f32.xlu0 %v1388
        %v1450 = vpop.xlane.xlu0 %1449
        %1451 = vmax.xlane.f32.xlu0 %v1393
        %v1452 = vpop.xlane.xlu0 %1451
        %1453 = vmax.xlane.f32.xlu0 %v1396
        %v1454 = vpop.xlane.xlu0 %1453
        %1455 = vmax.xlane.f32.xlu0 %v1401
        %v1456 = vpop.xlane.xlu0 %1455
        %1457 = vmax.xlane.f32.xlu0 %v1404
        %v1458 = vpop.xlane.xlu0 %1457
        %1459 = vmax.xlane.f32.xlu0 %v1409
        %v1460 = vpop.xlane.xlu0 %1459
        %1461 = vmax.xlane.f32.xlu0 %v1412
        %v1462 = vpop.xlane.xlu0 %1461
        %1463 = vmax.xlane.f32.xlu0 %v1417
        %v1464 = vpop.xlane.xlu0 %1463
        %1465 = vmax.xlane.f32.xlu0 %v1420
        %v1466 = vpop.xlane.xlu0 %1465
        %1467 = vmax.xlane.f32.xlu0 %v1425
        %v1468 = vpop.xlane.xlu0 %1467
        %1469 = vmax.xlane.f32.xlu0 %v1428
        %v1470 = vpop.xlane.xlu0 %1469
        %1471 = vmax.xlane.f32.xlu0 %v1433
        %v1472 = vpop.xlane.xlu0 %1471
        %1473 = vmax.xlane.f32.xlu0 %v1436
        %v1474 = vpop.xlane.xlu0 %1473
        %1475 = vmax.xlane.f32.xlu0 %v1441
        %v1476 = vpop.xlane.xlu0 %1475
        %1477 = vmax.xlane.f32.xlu0 %v1444
        %v1478 = vpop.xlane.xlu0 %1477
        %v1479 = vsub.f32 %v1385, %v1448
        %v1480 = vsub.f32 %v1388, %v1450
        %v1481 = vsub.f32 %v1393, %v1452
        %v1482 = vsub.f32 %v1396, %v1454
        %v1483 = vsub.f32 %v1401, %v1456
        %v1484 = vsub.f32 %v1404, %v1458
        %v1485 = vsub.f32 %v1409, %v1460
        %v1486 = vsub.f32 %v1412, %v1462
        %v1487 = vsub.f32 %v1417, %v1464
        %v1488 = vsub.f32 %v1420, %v1466
        %v1489 = vsub.f32 %v1425, %v1468
        %v1490 = vsub.f32 %v1428, %v1470
        %v1491 = vsub.f32 %v1433, %v1472
        %v1492 = vsub.f32 %v1436, %v1474
        %v1493 = vsub.f32 %v1441, %v1476
        %v1494 = vsub.f32 %v1444, %v1478
        %v1495 = vmul.f32 %v1479, 1.442695
        %v1496 = vpow.pop %v1495
        %v1497 = vmul.f32 %v1480, 1.442695
        %v1498 = vpow.pop %v1497
        %v1499 = vmul.f32 %v1481, 1.442695
        %v1500 = vpow.pop %v1499
        %v1501 = vmul.f32 %v1482, 1.442695
        %v1502 = vpow.pop %v1501
        %v1503 = vmul.f32 %v1483, 1.442695
        %v1504 = vpow.pop %v1503
        %v1505 = vmul.f32 %v1484, 1.442695
        %v1506 = vpow.pop %v1505
        %v1507 = vmul.f32 %v1485, 1.442695
        %v1508 = vpow.pop %v1507
        %v1509 = vmul.f32 %v1486, 1.442695
        %v1510 = vpow.pop %v1509
        %v1511 = vmul.f32 %v1487, 1.442695
        %v1512 = vpow.pop %v1511
        %v1513 = vmul.f32 %v1488, 1.442695
        %v1514 = vpow.pop %v1513
        %v1515 = vmul.f32 %v1489, 1.442695
        %v1516 = vpow.pop %v1515
        %v1517 = vmul.f32 %v1490, 1.442695
        %v1518 = vpow.pop %v1517
        %v1519 = vmul.f32 %v1491, 1.442695
        %v1520 = vpow.pop %v1519
        %v1521 = vmul.f32 %v1492, 1.442695
        %v1522 = vpow.pop %v1521
        %v1523 = vmul.f32 %v1493, 1.442695
        %v1524 = vpow.pop %v1523
        %v1525 = vmul.f32 %v1494, 1.442695
        %v1526 = vpow.pop %v1525
        %1527 = vadd.xlane.f32.xlu0 %v1496
        %v1528 = vpop.xlane.xlu0 %1527
        %1529 = vadd.xlane.f32.xlu0 %v1498
        %v1530 = vpop.xlane.xlu0 %1529
        %1531 = vadd.xlane.f32.xlu0 %v1500
        %v1532 = vpop.xlane.xlu0 %1531
        %1533 = vadd.xlane.f32.xlu0 %v1502
        %v1534 = vpop.xlane.xlu0 %1533
        %1535 = vadd.xlane.f32.xlu0 %v1504
        %v1536 = vpop.xlane.xlu0 %1535
        %1537 = vadd.xlane.f32.xlu0 %v1506
        %v1538 = vpop.xlane.xlu0 %1537
        %1539 = vadd.xlane.f32.xlu0 %v1508
        %v1540 = vpop.xlane.xlu0 %1539
        %1541 = vadd.xlane.f32.xlu0 %v1510
        %v1542 = vpop.xlane.xlu0 %1541
        %1543 = vadd.xlane.f32.xlu0 %v1512
        %v1544 = vpop.xlane.xlu0 %1543
        %1545 = vadd.xlane.f32.xlu0 %v1514
        %v1546 = vpop.xlane.xlu0 %1545
        %1547 = vadd.xlane.f32.xlu0 %v1516
        %v1548 = vpop.xlane.xlu0 %1547
        %1549 = vadd.xlane.f32.xlu0 %v1518
        %v1550 = vpop.xlane.xlu0 %1549
        %1551 = vadd.xlane.f32.xlu0 %v1520
        %v1552 = vpop.xlane.xlu0 %1551
        %1553 = vadd.xlane.f32.xlu0 %v1522
        %v1554 = vpop.xlane.xlu0 %1553
        %1555 = vadd.xlane.f32.xlu0 %v1524
        %v1556 = vpop.xlane.xlu0 %1555
        %1557 = vadd.xlane.f32.xlu0 %v1526
        %v1558 = vpop.xlane.xlu0 %1557
        %v1559 = vrcp.pop %v1528
        %v1560 = vrcp.pop %v1530
        %v1561 = vrcp.pop %v1532
        %v1562 = vrcp.pop %v1534
        %v1563 = vrcp.pop %v1536
        %v1564 = vrcp.pop %v1538
        %v1565 = vrcp.pop %v1540
        %v1566 = vrcp.pop %v1542
        %v1567 = vrcp.pop %v1544
        %v1568 = vrcp.pop %v1546
        %v1569 = vrcp.pop %v1548
        %v1570 = vrcp.pop %v1550
        %v1571 = vrcp.pop %v1552
        %v1572 = vrcp.pop %v1554
        %v1573 = vrcp.pop %v1556
        %v1574 = vrcp.pop %v1558
        %v1575 = vmul.f32 %v1528, %v1559
        %v1576 = vmul.f32 %v1530, %v1560
        %v1577 = vmul.f32 %v1532, %v1561
        %v1578 = vmul.f32 %v1534, %v1562
        %v1579 = vmul.f32 %v1536, %v1563
        %v1580 = vmul.f32 %v1538, %v1564
        %v1581 = vmul.f32 %v1540, %v1565
        %v1582 = vmul.f32 %v1542, %v1566
        %v1583 = vmul.f32 %v1544, %v1567
        %v1584 = vmul.f32 %v1546, %v1568
        %v1585 = vmul.f32 %v1548, %v1569
        %v1586 = vmul.f32 %v1550, %v1570
        %v1587 = vmul.f32 %v1552, %v1571
        %v1588 = vmul.f32 %v1554, %v1572
        %v1589 = vmul.f32 %v1556, %v1573
        %v1590 = vmul.f32 %v1558, %v1574
        %v1591 = vsub.f32 2.0, %v1575
        %v1592 = vsub.f32 2.0, %v1576
        %v1593 = vsub.f32 2.0, %v1577
        %v1594 = vsub.f32 2.0, %v1578
        %v1595 = vsub.f32 2.0, %v1579
        %v1596 = vsub.f32 2.0, %v1580
        %v1597 = vsub.f32 2.0, %v1581
        %v1598 = vsub.f32 2.0, %v1582
        %v1599 = vsub.f32 2.0, %v1583
        %v1600 = vsub.f32 2.0, %v1584
        %v1601 = vsub.f32 2.0, %v1585
        %v1602 = vsub.f32 2.0, %v1586
        %v1603 = vsub.f32 2.0, %v1587
        %v1604 = vsub.f32 2.0, %v1588
        %v1605 = vsub.f32 2.0, %v1589
        %v1606 = vsub.f32 2.0, %v1590
        %v1607 = vmul.f32 %v1559, %v1591
        %v1608 = vmul.f32 %v1560, %v1592
        %v1609 = vmul.f32 %v1561, %v1593
        %v1610 = vmul.f32 %v1562, %v1594
        %v1611 = vmul.f32 %v1563, %v1595
        %v1612 = vmul.f32 %v1564, %v1596
        %v1613 = vmul.f32 %v1565, %v1597
        %v1614 = vmul.f32 %v1566, %v1598
        %v1615 = vmul.f32 %v1567, %v1599
        %v1616 = vmul.f32 %v1568, %v1600
        %v1617 = vmul.f32 %v1569, %v1601
        %v1618 = vmul.f32 %v1570, %v1602
        %v1619 = vmul.f32 %v1571, %v1603
        %v1620 = vmul.f32 %v1572, %v1604
        %v1621 = vmul.f32 %v1573, %v1605
        %v1622 = vmul.f32 %v1574, %v1606
        %v1623 = vmul.f32 %v1496, %v1607
        %v1624 = vmul.f32 %v1498, %v1608
        %v1625 = vmul.f32 %v1500, %v1609
        %v1626 = vmul.f32 %v1502, %v1610
        %v1627 = vmul.f32 %v1504, %v1611
        %v1628 = vmul.f32 %v1506, %v1612
        %v1629 = vmul.f32 %v1508, %v1613
        %v1630 = vmul.f32 %v1510, %v1614
        %v1631 = vmul.f32 %v1512, %v1615
        %v1632 = vmul.f32 %v1514, %v1616
        %v1633 = vmul.f32 %v1516, %v1617
        %v1634 = vmul.f32 %v1518, %v1618
        %v1635 = vmul.f32 %v1520, %v1619
        %v1636 = vmul.f32 %v1522, %v1620
        %v1637 = vmul.f32 %v1524, %v1621
        %v1638 = vmul.f32 %v1526, %v1622
        %v1639 = vpack.c.bf16 %v1624, %v1623
        %v1640 = vpack.c.bf16 %v1626, %v1625
        %v1641 = vpack.c.bf16 %v1628, %v1627
        %v1642 = vpack.c.bf16 %v1630, %v1629
        %v1643 = vpack.c.bf16 %v1632, %v1631
        %v1644 = vpack.c.bf16 %v1634, %v1633
        %v1645 = vpack.c.bf16 %v1636, %v1635
        %v1646 = vpack.c.bf16 %v1638, %v1637
        %v1647 = vld [vmem:[#allocation3] sm:$0xff]
        %v1648 = vld [vmem:[#allocation3 + $0x8] sm:$0xff]
        %v1649 = vld [vmem:[#allocation3 + $0x10] sm:$0xff]
        %v1650 = vld [vmem:[#allocation3 + $0x18] sm:$0xff]
        %v1651 = vld [vmem:[#allocation3 + $0x20] sm:$0xff]
        %v1652 = vld [vmem:[#allocation3 + $0x28] sm:$0xff]
        %v1653 = vld [vmem:[#allocation3 + $0x30] sm:$0xff]
        %v1654 = vld [vmem:[#allocation3 + $0x38] sm:$0xff]
        %1655 = vmatprep.subr.bf16.mxu0 0
        %1656 = vmatpush1.bf16.msra.mxu0 %v1647
        %1657 = vmatprep.subr.bf16.mxu0 0
        %1658 = vmatpush1.bf16.msra.mxu0 %v1648
        %1659 = vmatprep.subr.bf16.mxu0 0
        %1660 = vmatpush1.bf16.msra.mxu0 %v1649
        %1661 = vmatprep.subr.bf16.mxu0 0
        %1662 = vmatpush1.bf16.msra.mxu0 %v1650
        %1663 = vmatprep.subr.bf16.mxu0 0
        %1664 = vmatpush1.bf16.msra.mxu0 %v1651
        %1665 = vmatprep.subr.bf16.mxu0 0
        %1666 = vmatpush1.bf16.msra.mxu0 %v1652
        %1667 = vmatprep.subr.bf16.mxu0 0
        %1668 = vmatpush1.bf16.msra.mxu0 %v1653
        %1669 = vmatprep.subr.bf16.mxu0 0
        %1670 = vmatpush1.bf16.msra.mxu0 %v1654
        %1671 = vmatprep.subr.bf16.mxu0 0
        %1672 = vmatpush1.bf16.msra.mxu0 0
        %1673 = vmatprep.subr.bf16.mxu0 0
        %1674 = vmatpush1.bf16.msra.mxu0 0
        %1675 = vmatprep.subr.bf16.mxu0 0
        %1676 = vmatpush1.bf16.msra.mxu0 0
        %1677 = vmatprep.subr.bf16.mxu0 0
        %1678 = vmatpush1.bf16.msra.mxu0 0
        %1679 = vmatprep.subr.bf16.mxu0 0
        %1680 = vmatpush1.bf16.msra.mxu0 0
        %1681 = vmatprep.subr.bf16.mxu0 0
        %1682 = vmatpush1.bf16.msra.mxu0 0
        %1683 = vmatprep.subr.bf16.mxu0 0
        %1684 = vmatpush1.bf16.msra.mxu0 0
        %1685 = vmatprep.subr.bf16.mxu0 0
        %1686 = vmatpush1.bf16.msra.mxu0 0
        %1687 = vmatprep.mubr.bf16.mxu0 0
        %1688 = vmatmul.mubr.bf16.gmra.mrb[0].mxu0 %v1639
        %v1689 = vpop.f32.mrb[0].mxu0
        %v1690 = vadd.f32 0.0, %v1689
        %v1691 = vpop.f32.mrb[0].mxu0
        %v1692 = vpop.f32.mrb[0].mxu0
        %v1693 = vadd.f32 0.0, %v1692
        %v1694 = vpop.f32.mrb[0].mxu0
        %1695 = vmatprep.mubr.bf16.mxu0 0
        %1696 = vmatmul.mubr.bf16.gmra.mrb[0].mxu0 %v1640
        %v1697 = vpop.f32.mrb[0].mxu0
        %v1698 = vadd.f32 0.0, %v1697
        %v1699 = vpop.f32.mrb[0].mxu0
        %v1700 = vpop.f32.mrb[0].mxu0
        %v1701 = vadd.f32 0.0, %v1700
        %v1702 = vpop.f32.mrb[0].mxu0
        %1703 = vmatprep.mubr.bf16.mxu0 0
        %1704 = vmatmul.mubr.bf16.gmra.mrb[0].mxu0 %v1641
        %v1705 = vpop.f32.mrb[0].mxu0
        %v1706 = vadd.f32 0.0, %v1705
        %v1707 = vpop.f32.mrb[0].mxu0
        %v1708 = vpop.f32.mrb[0].mxu0
        %v1709 = vadd.f32 0.0, %v1708
        %v1710 = vpop.f32.mrb[0].mxu0
        %1711 = vmatprep.mubr.bf16.mxu0 0
        %1712 = vmatmul.mubr.bf16.gmra.mrb[0].mxu0 %v1642
        %v1713 = vpop.f32.mrb[0].mxu0
        %v1714 = vadd.f32 0.0, %v1713
        %v1715 = vpop.f32.mrb[0].mxu0
        %v1716 = vpop.f32.mrb[0].mxu0
        %v1717 = vadd.f32 0.0, %v1716
        %v1718 = vpop.f32.mrb[0].mxu0
        %1719 = vmatprep.mubr.bf16.mxu0 0
        %1720 = vmatmul.mubr.bf16.gmra.mrb[0].mxu0 %v1643
        %v1721 = vpop.f32.mrb[0].mxu0
        %v1722 = vadd.f32 0.0, %v1721
        %v1723 = vpop.f32.mrb[0].mxu0
        %v1724 = vpop.f32.mrb[0].mxu0
        %v1725 = vadd.f32 0.0, %v1724
        %v1726 = vpop.f32.mrb[0].mxu0
        %1727 = vmatprep.mubr.bf16.mxu0 0
        %1728 = vmatmul.mubr.bf16.gmra.mrb[0].mxu0 %v1644
        %v1729 = vpop.f32.mrb[0].mxu0
        %v1730 = vadd.f32 0.0, %v1729
        %v1731 = vpop.f32.mrb[0].mxu0
        %v1732 = vpop.f32.mrb[0].mxu0
        %v1733 = vadd.f32 0.0, %v1732
        %v1734 = vpop.f32.mrb[0].mxu0
        %1735 = vmatprep.mubr.bf16.mxu0 0
        %1736 = vmatmul.mubr.bf16.gmra.mrb[0].mxu0 %v1645
        %v1737 = vpop.f32.mrb[0].mxu0
        %v1738 = vadd.f32 0.0, %v1737
        %v1739 = vpop.f32.mrb[0].mxu0
        %v1740 = vpop.f32.mrb[0].mxu0
        %v1741 = vadd.f32 0.0, %v1740
        %v1742 = vpop.f32.mrb[0].mxu0
        %1743 = vmatprep.mubr.bf16.mxu0 0
        %1744 = vmatmul.mubr.bf16.gmra.mrb[0].mxu0 %v1646
        %v1745 = vpop.f32.mrb[0].mxu0
        %v1746 = vadd.f32 0.0, %v1745
        %v1747 = vpop.f32.mrb[0].mxu0
        %v1748 = vpop.f32.mrb[0].mxu0
        %v1749 = vadd.f32 0.0, %v1748
        %v1750 = vpop.f32.mrb[0].mxu0
        %1751 = vdwg.mxu0
        %v1752 = vpack.c.bf16 %v1693, %v1690
        %v1753 = vpack.c.bf16 %v1701, %v1698
        %v1754 = vpack.c.bf16 %v1709, %v1706
        %v1755 = vpack.c.bf16 %v1717, %v1714
        %v1756 = vpack.c.bf16 %v1725, %v1722
        %v1757 = vpack.c.bf16 %v1733, %v1730
        %v1758 = vpack.c.bf16 %v1741, %v1738
        %v1759 = vpack.c.bf16 %v1749, %v1746
        %v1760 = vld [vmem:[#allocation15] sm:$0xf]
        %v1761 = vld [vmem:[#allocation15 + $0x4] sm:$0xf]
        %v1762 = vld [vmem:[#allocation15 + $0x8] sm:$0xf]
        %v1763 = vld [vmem:[#allocation15 + $0xc] sm:$0xf]
        %v1764 = vld [vmem:[#allocation15 + $0x10] sm:$0xf]
        %v1765 = vld [vmem:[#allocation15 + $0x14] sm:$0xf]
        %v1766 = vld [vmem:[#allocation15 + $0x18] sm:$0xf]
        %v1767 = vld [vmem:[#allocation15 + $0x1c] sm:$0xf]
        %v1768 = vld [vmem:[#allocation15 + $0x20] sm:$0xf]
        %v1769 = vld [vmem:[#allocation15 + $0x24] sm:$0xf]
        %v1770 = vld [vmem:[#allocation15 + $0x28] sm:$0xf]
        %v1771 = vld [vmem:[#allocation15 + $0x2c] sm:$0xf]
        %v1772 = vld [vmem:[#allocation15 + $0x30] sm:$0xf]
        %v1773 = vld [vmem:[#allocation15 + $0x34] sm:$0xf]
        %v1774 = vld [vmem:[#allocation15 + $0x38] sm:$0xf]
        %v1775 = vld [vmem:[#allocation15 + $0x3c] sm:$0xf]
        %v1776 = vld [vmem:[%s10] sm:$0x1]
        %v1778 = vlaneseq
        %v1779 = vshrl.u32 %v1778, 7
        %v1780 = vsub.s32 0, %v1779
        %v1781 = vrot.slane %v1776, %v1780
        %v1799 = vunpack.c.l.b16 %v1760
        %v1800 = vunpack.c.l.b16 %v1761
        %v1801 = vunpack.c.l.b16 %v1762
        %v1802 = vunpack.c.l.b16 %v1763
        %v1803 = vunpack.c.l.b16 %v1764
        %v1804 = vunpack.c.l.b16 %v1765
        %v1805 = vunpack.c.l.b16 %v1766
        %v1806 = vunpack.c.l.b16 %v1767
        %v1807 = vunpack.c.l.b16 %v1768
        %v1808 = vunpack.c.l.b16 %v1769
        %v1809 = vunpack.c.l.b16 %v1770
        %v1810 = vunpack.c.l.b16 %v1771
        %v1811 = vunpack.c.l.b16 %v1772
        %v1812 = vunpack.c.l.b16 %v1773
        %v1813 = vunpack.c.l.b16 %v1774
        %v1814 = vunpack.c.l.b16 %v1775
        %v1815 = vpack.c.b16 %v1800, %v1799
        %v1816 = vpack.c.b16 %v1802, %v1801
        %v1817 = vpack.c.b16 %v1804, %v1803
        %v1818 = vpack.c.b16 %v1806, %v1805
        %v1819 = vpack.c.b16 %v1808, %v1807
        %v1820 = vpack.c.b16 %v1810, %v1809
        %v1821 = vpack.c.b16 %v1812, %v1811
        %v1822 = vpack.c.b16 %v1814, %v1813
        %1831 = vmatprep.subr.bf16.mxu0 0
        %1832 = vmatpush1.bf16.msra.mxu0 %v1815
        %1833 = vmatprep.subr.bf16.mxu0 0
        %1834 = vmatpush1.bf16.msra.mxu0 %v1816
        %1835 = vmatprep.subr.bf16.mxu0 0
        %1836 = vmatpush1.bf16.msra.mxu0 %v1817
        %1837 = vmatprep.subr.bf16.mxu0 0
        %1838 = vmatpush1.bf16.msra.mxu0 %v1818
        %1839 = vmatprep.subr.bf16.mxu0 0
        %1840 = vmatpush1.bf16.msra.mxu0 %v1819
        %1841 = vmatprep.subr.bf16.mxu0 0
        %1842 = vmatpush1.bf16.msra.mxu0 %v1820
        %1843 = vmatprep.subr.bf16.mxu0 0
        %1844 = vmatpush1.bf16.msra.mxu0 %v1821
        %1845 = vmatprep.subr.bf16.mxu0 0
        %1846 = vmatpush1.bf16.msra.mxu0 %v1822
        %1847 = vmatprep.subr.bf16.mxu0 0
        %1848 = vmatpush1.bf16.msra.mxu0 0
        %1849 = vmatprep.subr.bf16.mxu0 0
        %1850 = vmatpush1.bf16.msra.mxu0 0
        %1851 = vmatprep.subr.bf16.mxu0 0
        %1852 = vmatpush1.bf16.msra.mxu0 0
        %1853 = vmatprep.subr.bf16.mxu0 0
        %1854 = vmatpush1.bf16.msra.mxu0 0
        %1855 = vmatprep.subr.bf16.mxu0 0
        %1856 = vmatpush1.bf16.msra.mxu0 0
        %1857 = vmatprep.subr.bf16.mxu0 0
        %1858 = vmatpush1.bf16.msra.mxu0 0
        %1859 = vmatprep.subr.bf16.mxu0 0
        %1860 = vmatpush1.bf16.msra.mxu0 0
        %1861 = vmatprep.subr.bf16.mxu0 0
        %1862 = vmatpush1.bf16.msra.mxu0 0
        %1863 = vmatprep.mubr.bf16.mxu0 0
        %1864 = vmatmul.mubr.bf16.gmra.mrb[0].mxu0 %v1752
        %v1865 = vpop.f32.mrb[0].mxu0
        %v1866 = vadd.f32 %v1781, %v1865
        %v1867 = vpop.f32.mrb[0].mxu0
        %v1868 = vpop.f32.mrb[0].mxu0
        %v1869 = vadd.f32 %v1781, %v1868
        %v1870 = vpop.f32.mrb[0].mxu0
        %1871 = vmatprep.mubr.bf16.mxu0 0
        %1872 = vmatmul.mubr.bf16.gmra.mrb[0].mxu0 %v1753
        %v1873 = vpop.f32.mrb[0].mxu0
        %v1874 = vadd.f32 %v1781, %v1873
        %v1875 = vpop.f32.mrb[0].mxu0
        %v1876 = vpop.f32.mrb[0].mxu0
        %v1877 = vadd.f32 %v1781, %v1876
        %v1878 = vpop.f32.mrb[0].mxu0
        %1879 = vmatprep.mubr.bf16.mxu0 0
        %1880 = vmatmul.mubr.bf16.gmra.mrb[0].mxu0 %v1754
        %v1881 = vpop.f32.mrb[0].mxu0
        %v1882 = vadd.f32 %v1781, %v1881
        %v1883 = vpop.f32.mrb[0].mxu0
        %v1884 = vpop.f32.mrb[0].mxu0
        %v1885 = vadd.f32 %v1781, %v1884
        %v1886 = vpop.f32.mrb[0].mxu0
        %1887 = vmatprep.mubr.bf16.mxu0 0
        %1888 = vmatmul.mubr.bf16.gmra.mrb[0].mxu0 %v1755
        %v1889 = vpop.f32.mrb[0].mxu0
        %v1890 = vadd.f32 %v1781, %v1889
        %v1891 = vpop.f32.mrb[0].mxu0
        %v1892 = vpop.f32.mrb[0].mxu0
        %v1893 = vadd.f32 %v1781, %v1892
        %v1894 = vpop.f32.mrb[0].mxu0
        %1895 = vmatprep.mubr.bf16.mxu0 0
        %1896 = vmatmul.mubr.bf16.gmra.mrb[0].mxu0 %v1756
        %v1897 = vpop.f32.mrb[0].mxu0
        %v1898 = vadd.f32 %v1781, %v1897
        %v1899 = vpop.f32.mrb[0].mxu0
        %v1900 = vpop.f32.mrb[0].mxu0
        %v1901 = vadd.f32 %v1781, %v1900
        %v1902 = vpop.f32.mrb[0].mxu0
        %1903 = vmatprep.mubr.bf16.mxu0 0
        %1904 = vmatmul.mubr.bf16.gmra.mrb[0].mxu0 %v1757
        %v1905 = vpop.f32.mrb[0].mxu0
        %v1906 = vadd.f32 %v1781, %v1905
        %v1907 = vpop.f32.mrb[0].mxu0
        %v1908 = vpop.f32.mrb[0].mxu0
        %v1909 = vadd.f32 %v1781, %v1908
        %v1910 = vpop.f32.mrb[0].mxu0
        %1911 = vmatprep.mubr.bf16.mxu0 0
        %1912 = vmatmul.mubr.bf16.gmra.mrb[0].mxu0 %v1758
        %v1913 = vpop.f32.mrb[0].mxu0
        %v1914 = vadd.f32 %v1781, %v1913
        %v1915 = vpop.f32.mrb[0].mxu0
        %v1916 = vpop.f32.mrb[0].mxu0
        %v1917 = vadd.f32 %v1781, %v1916
        %v1918 = vpop.f32.mrb[0].mxu0
        %1919 = vmatprep.mubr.bf16.mxu0 0
        %1920 = vmatmul.mubr.bf16.gmra.mrb[0].mxu0 %v1759
        %v1921 = vpop.f32.mrb[0].mxu0
        %v1922 = vadd.f32 %v1781, %v1921
        %v1923 = vpop.f32.mrb[0].mxu0
        %v1924 = vpop.f32.mrb[0].mxu0
        %v1925 = vadd.f32 %v1781, %v1924
        %v1926 = vpop.f32.mrb[0].mxu0
        %1927 = vdwg.mxu0
        %1928 = vst [vmem:[%s590] sm:$0xff] %v1866
        %1929 = vst [vmem:[%s590 + $0x8] sm:$0xff] %v1869
        %1930 = vst [vmem:[%s590 + $0x10] sm:$0xff] %v1874
        %1931 = vst [vmem:[%s590 + $0x18] sm:$0xff] %v1877
        %1932 = vst [vmem:[%s590 + $0x20] sm:$0xff] %v1882
        %1933 = vst [vmem:[%s590 + $0x28] sm:$0xff] %v1885
        %1934 = vst [vmem:[%s590 + $0x30] sm:$0xff] %v1890
        %1935 = vst [vmem:[%s590 + $0x38] sm:$0xff] %v1893
        %1936 = vst [vmem:[%s590 + $0x40] sm:$0xff] %v1898
        %1937 = vst [vmem:[%s590 + $0x48] sm:$0xff] %v1901
        %1938 = vst [vmem:[%s590 + $0x50] sm:$0xff] %v1906
        %1939 = vst [vmem:[%s590 + $0x58] sm:$0xff] %v1909
        %1940 = vst [vmem:[%s590 + $0x60] sm:$0xff] %v1914
        %1941 = vst [vmem:[%s590 + $0x68] sm:$0xff] %v1917
        %1942 = vst [vmem:[%s590 + $0x70] sm:$0xff] %v1922
        %1943 = vst [vmem:[%s590 + $0x78] sm:$0xff] %v1925
        %1944 = vst [vmem:[%s597] sm:$0xff] %v1623
        %1945 = vst [vmem:[%s597 + $0x8] sm:$0xff] %v1624
        %1946 = vst [vmem:[%s597 + $0x10] sm:$0xff] %v1625
        %1947 = vst [vmem:[%s597 + $0x18] sm:$0xff] %v1626
        %1948 = vst [vmem:[%s597 + $0x20] sm:$0xff] %v1627
        %1949 = vst [vmem:[%s597 + $0x28] sm:$0xff] %v1628
        %1950 = vst [vmem:[%s597 + $0x30] sm:$0xff] %v1629
        %1951 = vst [vmem:[%s597 + $0x38] sm:$0xff] %v1630
        %1952 = vst [vmem:[%s597 + $0x40] sm:$0xff] %v1631
        %1953 = vst [vmem:[%s597 + $0x48] sm:$0xff] %v1632
        %1954 = vst [vmem:[%s597 + $0x50] sm:$0xff] %v1633
        %1955 = vst [vmem:[%s597 + $0x58] sm:$0xff] %v1634
        %1956 = vst [vmem:[%s597 + $0x60] sm:$0xff] %v1635
        %1957 = vst [vmem:[%s597 + $0x68] sm:$0xff] %v1636
        %1958 = vst [vmem:[%s597 + $0x70] sm:$0xff] %v1637
        %1959 = vst [vmem:[%s597 + $0x78] sm:$0xff] %v1638
        %s1960 = sand.u32 %s308, 1
        %s1961 = scalar_lea.sflag [#allocation6], %s1960
        %s1962 = sand.u32 %s308, 1
        %s1963 = smul.addr %s1962, 128
        %s1964 = scalar_lea.vmem [#allocation16], %s1963
        %s1965 = sand.u32 %s336, 1
        %s1966 = scalar_lea.sflag [#allocation18], %s1965
        %s1967 = sand.u32 %s336, 1
        %s1968 = smul.addr %s1967, 128
        %s1969 = scalar_lea.vmem [#allocation17], %s1968
        // Predicated region
        $region97: #{tpu_custom_call.1} parent=63 // pred_check
          %p1970 = pneg %p318
        $region98: #{tpu_custom_call.1} parent=63 // pred_check_branch
          %1972 = sbr.rel (%p1970) target = $region100
        $region99: #{tpu_custom_call.1} parent=63 // pred_region
          %s1973 = smul.u32 16, %s43
          %s1975 = ssub.s32 2048, 2048
          %1976 = vsyncadd %s1961, %s1975
          %s1977 = smul.addr %s42, 16
          %s1978 = sadd.s32 %s1973, %s1977
          %s1979 = smul.addr %s1978, 128
          %s1980 = scalar_lea.hbm %s11, %s1979
          %s1981 = sshll.u32 %s1964, 4
          %s1982 = int_to_ptr.vmem [resolvable:$true] %s1981
          %1987 = dma.vmem_to_hbm [thread:$0]  %s1982, 2048, %s1980, %s1961, 128, 128, 8
        $region100: #{tpu_custom_call.1} parent=63 // pred_fallthru
          _
        // Predicated region
        $region101: #{tpu_custom_call.1} parent=63 // pred_check
          %p1988 = pneg %p346
        $region102: #{tpu_custom_call.1} parent=63 // pred_check_branch
          %1990 = sbr.rel (%p1988) target = $region104
        $region103: #{tpu_custom_call.1} parent=63 // pred_region
          %s1991 = smul.u32 16, %s43
          %s1993 = ssub.s32 2048, 2048
          %1994 = vsyncadd %s1966, %s1993
          %s1995 = smul.addr %s42, 16
          %s1996 = sadd.s32 %s1991, %s1995
          %s1997 = smul.addr %s1996, 128
          %s1998 = scalar_lea.hbm %s12, %s1997
          %s1999 = sshll.u32 %s1969, 4
          %s2000 = int_to_ptr.vmem [resolvable:$true] %s1999
          %2005 = dma.vmem_to_hbm [thread:$0]  %s2000, 2048, %s1998, %s1966, 128, 128, 8
        $region104: #{tpu_custom_call.1} parent=63 // pred_fallthru
          _
      $region64: #{tpu_custom_call.1} parent=5 // pred_fallthru
        _
      %p2006 = scmp.le.s32.totalorder 2, %s33
      // Predicated region
      $region105: #{tpu_custom_call.1} parent=5 // pred_check
        %p2007 = pneg %p2006
      $region106: #{tpu_custom_call.1} parent=5 // pred_check_branch
        %2009 = sbr.rel (%p2007) target = $region108
      $region107: #{tpu_custom_call.1} parent=5 // pred_region
        %s2010 = ssub.s32 %s33, 2
        // Predicated region
        $region109: #{tpu_custom_call.1} parent=107 // pred_check
          %p2011 = pneg %p324
        $region110: #{tpu_custom_call.1} parent=107 // pred_check_branch
          %2013 = sbr.rel (%p2011) target = $region112
        $region111: #{tpu_custom_call.1} parent=107 // pred_region
          %s2014 = sand.u32 %s309, 1
          %s2015 = scalar_lea.sflag [#allocation6], %s2014
          %s2016 = sand.u32 %s309, 1
          %s2017 = smul.addr %s2016, 128
          %s2018 = scalar_lea.vmem [#allocation16], %s2017
          %2019 = dma.done %s2015, 2048
        $region112: #{tpu_custom_call.1} parent=107 // pred_fallthru
          _
        // Predicated region
        $region113: #{tpu_custom_call.1} parent=107 // pred_check
          %p2020 = pneg %p352
        $region114: #{tpu_custom_call.1} parent=107 // pred_check_branch
          %2022 = sbr.rel (%p2020) target = $region116
        $region115: #{tpu_custom_call.1} parent=107 // pred_region
          %s2023 = sand.u32 %s337, 1
          %s2024 = scalar_lea.sflag [#allocation18], %s2023
          %s2025 = sand.u32 %s337, 1
          %s2026 = smul.addr %s2025, 128
          %s2027 = scalar_lea.vmem [#allocation17], %s2026
          %2028 = dma.done %s2024, 2048
        $region116: #{tpu_custom_call.1} parent=107 // pred_fallthru
          _
      $region108: #{tpu_custom_call.1} parent=5 // pred_fallthru
        _
    $region6: #{tpu_custom_call.1} parent=1 // loop_footer
      %s37 = sadd.s32 1, %s33
    $region7: #{tpu_custom_call.1} parent=1 // loop_footer_branch
      %32 = sbr.rel target = $region3
    $region8: #{tpu_custom_call.1} parent=1 // loop_exit
      _
    %2029 = vsyncpa [#allocation5], 1
    %s2030 = scalar_lea.sflag [#allocation5], 1
    %2031 = vsyncpa %s2030, 1
    %2032 = vsyncpa [#allocation8], 1
    %s2033 = scalar_lea.sflag [#allocation8], 1
    %2034 = vsyncpa %s2033, 1
    %2035 = vsyncpa [#allocation11], 1
    %2036 = vsyncpa [#allocation14], 1
    %2037 = vsyncpa [#allocation6], 1
    %s2038 = scalar_lea.sflag [#allocation6], 1
    %2039 = vsyncpa %s2038, 1
    %2040 = vsyncpa [#allocation18], 1
    %s2041 = scalar_lea.sflag [#allocation18], 1
    %2042 = vsyncpa %s2041, 1

</llo_original>
